<compile_context>
chip_gen: v7x
topology: tpu7x:2x2x1
jax: 0.10.0
libtpu: 0.0.40
codegen_flags: <defaults>
</compile_context>

<pallas_src>
import functools

import jax
import jax.numpy as jnp
from jax.experimental import pallas as pl
from jax.experimental.pallas import tpu as pltpu


def _round_up(x, m):
    return (x + m - 1) // m * m


def _flowhead_kernel(x_ref, mask_ref, w1_ref, b1_ref, w2_ref, b2_ref, out_ref,
                     *, Wp, E1, NOUT):
    # x_ref   : (1, Cin, E2)        bf16  zero-padded, flattened, slack-extended image
    # mask_ref: (1, E1)             f32   1.0 on interior (non-border) padded pixels
    # w1_ref  : (Chid, 9*Cin)       bf16  conv1 weights, K ordered as (dy, dx, cin)
    # b1_ref  : (Chid, 1)           f32
    # w2_ref  : (Cout_pad, 9*Chid)  bf16  conv2 weights (Cout zero-padded to 8)
    # b2_ref  : (Cout_pad, 1)       f32
    # out_ref : (1, Cout_pad, NOUT) f32   conv2 result at padded pixel q = column index
    B = Wp + 1                      # max |flat shift| of a 3x3 tap
    x = x_ref[0]                    # (Cin, E2) bf16

    # ---- conv1: single bf16 MXU matmul, K = 9*Cin ------------------------
    # Tap (dy, dx) of the flattened padded image is a contiguous lane slice
    # of the slack-extended row (no roll scratch, no reshape per tap).
    taps1 = []
    for dy in range(3):
        for dx in range(3):
            off = B + (dy - 1) * Wp + (dx - 1)           # static, in [0, 2*B]
            taps1.append(x[:, off:off + E1])
    lhs1 = jnp.concatenate(taps1, axis=0)                # (9*Cin, E1) bf16
    h = jnp.dot(w1_ref[...], lhs1,
                preferred_element_type=jnp.float32)      # (Chid, E1) f32
    h = jnp.maximum(h + b1_ref[...], 0.0)                # bias + ReLU in f32

    # Zero every column that is not an interior pixel of the padded image.
    # This discards conv1 junk at border/slack columns AND realizes conv2's
    # zero padding — no scratch round trip needed.  (h >= 0 and finite, so a
    # {0,1} multiply is exact.)
    h = (h * mask_ref[...]).astype(jnp.bfloat16)         # (Chid, E1) bf16

    # ---- conv2: single bf16 MXU matmul, K = 9*Chid -----------------------
    taps2 = []
    for dy in range(3):
        for dx in range(3):
            off = B + (dy - 1) * Wp + (dx - 1)
            taps2.append(h[:, off:off + NOUT])
    lhs2 = jnp.concatenate(taps2, axis=0)                # (9*Chid, NOUT) bf16
    y = jnp.dot(w2_ref[...], lhs2,
                preferred_element_type=jnp.float32)      # (Cout_pad, NOUT) f32
    out_ref[0] = y + b2_ref[...]                         # lane-dense, unmasked store


def flow_head(x, w1, b1, w2, b2):
    """x: (N, Cin, H, W) f32 NCHW; w1: (Chid, Cin, 3, 3); w2: (Cout, Chid, 3, 3)."""
    N, Cin, H, W = x.shape
    Chid = w1.shape[0]
    Cout = w2.shape[0]
    assert w1.shape == (Chid, Cin, 3, 3)
    assert w2.shape == (Cout, Chid, 3, 3)

    Hp, Wp = H + 2, W + 2
    NPAD = Hp * Wp                          # padded pixel count
    B = Wp + 1                              # max |flat shift| of a 3x3 tap
    COUT_PAD = 8                            # pad conv2 output channels 2 -> 8
    NOUT = _round_up(NPAD, 128)             # lane-dense output / conv2 width
    E1 = _round_up(NOUT + 2 * B, 128)       # lane-dense conv1 evaluation width
    E2 = E1 + 2 * B                         # slack-extended input width

    # Activations: zero-pad spatially, flatten (Hp, Wp) into lanes, add zero
    # slack so every 3x3 tap is a static in-range lane slice.
    xpad = jnp.pad(x, ((0, 0), (0, 0), (1, 1), (1, 1))).reshape(N, Cin, NPAD)
    x_ext = jnp.pad(xpad, ((0, 0), (0, 0), (2 * B, E2 - NPAD - 2 * B)))
    x_ext = x_ext.astype(jnp.bfloat16)

    # Interior-pixel mask over conv1's window: column u <-> padded pixel q = u - B.
    q = jnp.arange(E1) - B
    i = q // Wp
    j = q % Wp
    interior = (q >= 0) & (q < NPAD) & (i >= 1) & (i <= H) & (j >= 1) & (j <= W)
    mask = interior.astype(jnp.float32).reshape(1, E1)

    # Weights: OIHW -> (O, 9*I), K ordered (dy, dx, cin) to match the kernel.
    w1m = jnp.transpose(w1, (0, 2, 3, 1)).reshape(Chid, 9 * Cin)
    w1m = w1m.astype(jnp.bfloat16)
    w2m = jnp.transpose(w2, (0, 2, 3, 1)).reshape(Cout, 9 * Chid)
    w2m = jnp.pad(w2m, ((0, COUT_PAD - Cout), (0, 0))).astype(jnp.bfloat16)
    b1m = b1.reshape(Chid, 1).astype(jnp.float32)
    b2m = jnp.pad(b2.reshape(Cout, 1), ((0, COUT_PAD - Cout), (0, 0)))
    b2m = b2m.astype(jnp.float32)

    kernel = functools.partial(_flowhead_kernel, Wp=Wp, E1=E1, NOUT=NOUT)

    out = pl.pallas_call(
        kernel,
        out_shape=jax.ShapeDtypeStruct((N, COUT_PAD, NOUT), jnp.float32),
        grid=(N,),
        in_specs=[
            pl.BlockSpec((1, Cin, E2), lambda n: (n, 0, 0)),
            pl.BlockSpec((1, E1), lambda n: (0, 0)),
            pl.BlockSpec((Chid, 9 * Cin), lambda n: (0, 0)),
            pl.BlockSpec((Chid, 1), lambda n: (0, 0)),
            pl.BlockSpec((COUT_PAD, 9 * Chid), lambda n: (0, 0)),
            pl.BlockSpec((COUT_PAD, 1), lambda n: (0, 0)),
        ],
        out_specs=pl.BlockSpec((1, COUT_PAD, NOUT), lambda n: (n, 0, 0)),
        compiler_params=pltpu.CompilerParams(
            dimension_semantics=("parallel",)),
    )(x_ext, mask, w1m, b1m, w2m, b2m)

    # (N, 8, NOUT) -> NCHW (N, Cout, H, W): drop padded channels/columns and
    # the spatial border (free row-major reshape/slice in the wrapper).
    y = out[:, :Cout, :NPAD].reshape(N, Cout, Hp, Wp)[:, :, 1:H + 1, 1:W + 1]
    return y


def _reference(x, w1, b1, w2, b2):
    dn = ("NCHW", "OIHW", "NCHW")
    h = jax.lax.conv_general_dilated(x, w1, (1, 1), "SAME",
                                     dimension_numbers=dn)
    h = jnp.maximum(h + b1.reshape(1, -1, 1, 1), 0.0)
    y = jax.lax.conv_general_dilated(h, w2, (1, 1), "SAME",
                                     dimension_numbers=dn)
    return y + b2.reshape(1, -1, 1, 1)


if __name__ == "__main__":
    # small shapes consistent with the module (input_dim=32, hidden_dim=64)
    N, H, W = 2, 16, 16
    Cin, Chid = 32, 64

    key = jax.random.PRNGKey(0)
    k_x, k_w1, k_b1, k_w2, k_b2 = jax.random.split(key, 5)

    x = jax.random.normal(k_x, (N, Cin, H, W), dtype=jnp.float32)
    w1 = 0.05 * jax.random.normal(k_w1, (Chid, Cin, 3, 3), dtype=jnp.float32)
    b1 = 0.1 * jax.random.normal(k_b1, (Chid,), dtype=jnp.float32)
    w2 = 0.05 * jax.random.normal(k_w2, (2, Chid, 3, 3), dtype=jnp.float32)
    b2 = 0.1 * jax.random.normal(k_b2, (2,), dtype=jnp.float32)

    y = jax.block_until_ready(flow_head(x, w1, b1, w2, b2))
    y_ref = _reference(x, w1, b1, w2, b2)

    assert y.shape == (N, 2, H, W), y.shape
    max_err = float(jnp.max(jnp.abs(y - y_ref)))
    # bf16 MXU operands (f32 accumulation) -> loosened tolerance.
    assert jnp.allclose(y, y_ref, atol=3e-2, rtol=3e-2), max_err
    print("KERNEL_OK")
</pallas_src>

<mosaic_0001>
module attributes {stable_mosaic.version = 11 : i64} {
  func.func @_flowhead_kernel(%arg0: i32, %arg1: memref<1x32x550xbf16, #tpu.memory_space<vmem>>, %arg2: memref<1x512xf32, #tpu.memory_space<vmem>>, %arg3: memref<64x288xbf16, #tpu.memory_space<vmem>>, %arg4: memref<64x1xf32, #tpu.memory_space<vmem>>, %arg5: memref<8x576xbf16, #tpu.memory_space<vmem>>, %arg6: memref<8x1xf32, #tpu.memory_space<vmem>>, %arg7: memref<1x8x384xf32, #tpu.memory_space<vmem>>) attributes {dimension_semantics = [#tpu.dimension_semantics<parallel>], iteration_bounds = array<i64: 2>, scalar_prefetch = 0 : i64, scratch_operands = 0 : i64, tpu.core_type = #tpu.core_type<tc>, window_params = [{transform_indices = @transform_0, window_bounds = array<i64: 1, 32, 550>}, {pipeline_mode = #tpu.pipeline_mode<synchronous>, transform_indices = @transform_1, window_bounds = array<i64: 1, 512>}, {pipeline_mode = #tpu.pipeline_mode<synchronous>, transform_indices = @transform_2, window_bounds = array<i64: 64, 288>}, {pipeline_mode = #tpu.pipeline_mode<synchronous>, transform_indices = @transform_3, window_bounds = array<i64: 64, 1>}, {pipeline_mode = #tpu.pipeline_mode<synchronous>, transform_indices = @transform_4, window_bounds = array<i64: 8, 576>}, {pipeline_mode = #tpu.pipeline_mode<synchronous>, transform_indices = @transform_5, window_bounds = array<i64: 8, 1>}, {transform_indices = @transform_6, window_bounds = array<i64: 1, 8, 384>}]} {
    %c0 = arith.constant 0 : index
    %c0_0 = arith.constant 0 : index
    %c0_1 = arith.constant 0 : index
    %0 = vector.load %arg1[%c0, %c0_0, %c0_1] : memref<1x32x550xbf16, #tpu.memory_space<vmem>>, vector<1x32x550xbf16>
    %1 = vector.shape_cast %0 : vector<1x32x550xbf16> to vector<32x550xbf16>
    %2 = vector.extract_strided_slice %1 {offsets = [0, 0], sizes = [32, 512], strides = [1, 1]} : vector<32x550xbf16> to vector<32x512xbf16>
    %3 = vector.extract_strided_slice %1 {offsets = [0, 1], sizes = [32, 512], strides = [1, 1]} : vector<32x550xbf16> to vector<32x512xbf16>
    %4 = vector.extract_strided_slice %1 {offsets = [0, 2], sizes = [32, 512], strides = [1, 1]} : vector<32x550xbf16> to vector<32x512xbf16>
    %5 = vector.extract_strided_slice %1 {offsets = [0, 18], sizes = [32, 512], strides = [1, 1]} : vector<32x550xbf16> to vector<32x512xbf16>
    %6 = vector.extract_strided_slice %1 {offsets = [0, 19], sizes = [32, 512], strides = [1, 1]} : vector<32x550xbf16> to vector<32x512xbf16>
    %7 = vector.extract_strided_slice %1 {offsets = [0, 20], sizes = [32, 512], strides = [1, 1]} : vector<32x550xbf16> to vector<32x512xbf16>
    %8 = vector.extract_strided_slice %1 {offsets = [0, 36], sizes = [32, 512], strides = [1, 1]} : vector<32x550xbf16> to vector<32x512xbf16>
    %9 = vector.extract_strided_slice %1 {offsets = [0, 37], sizes = [32, 512], strides = [1, 1]} : vector<32x550xbf16> to vector<32x512xbf16>
    %10 = vector.extract_strided_slice %1 {offsets = [0, 38], sizes = [32, 512], strides = [1, 1]} : vector<32x550xbf16> to vector<32x512xbf16>
    %11 = tpu.concatenate %2, %3, %4, %5, %6, %7, %8, %9, %10 in 0 : vector<32x512xbf16>, vector<32x512xbf16>, vector<32x512xbf16>, vector<32x512xbf16>, vector<32x512xbf16>, vector<32x512xbf16>, vector<32x512xbf16>, vector<32x512xbf16>, vector<32x512xbf16> -> vector<288x512xbf16>
    %c0_2 = arith.constant 0 : index
    %c0_3 = arith.constant 0 : index
    %12 = vector.load %arg3[%c0_2, %c0_3] : memref<64x288xbf16, #tpu.memory_space<vmem>>, vector<64x288xbf16>
    %cst = arith.constant dense<0.000000e+00> : vector<64x512xf32>
    %13 = tpu.matmul %12, %11, %cst {dimension_numbers = #tpu.dot_dimension_numbers<[1], [0], [0], [1], [0, 0, 1, 1], [], []>} : vector<64x288xbf16>, vector<288x512xbf16>, vector<64x512xf32> -> vector<64x512xf32>
    %c0_4 = arith.constant 0 : index
    %c0_5 = arith.constant 0 : index
    %14 = vector.load %arg4[%c0_4, %c0_5] : memref<64x1xf32, #tpu.memory_space<vmem>>, vector<64x1xf32>
    %15 = vector.broadcast %14 : vector<64x1xf32> to vector<64x512xf32>
    %16 = arith.addf %13, %15 : vector<64x512xf32>
    %cst_6 = arith.constant 0.000000e+00 : f32
    %17 = vector.broadcast %cst_6 : f32 to vector<64x512xf32>
    %18 = arith.maximumf %16, %17 : vector<64x512xf32>
    %c0_7 = arith.constant 0 : index
    %c0_8 = arith.constant 0 : index
    %19 = vector.load %arg2[%c0_7, %c0_8] : memref<1x512xf32, #tpu.memory_space<vmem>>, vector<1x512xf32>
    %20 = vector.broadcast %19 : vector<1x512xf32> to vector<64x512xf32>
    %21 = arith.mulf %18, %20 : vector<64x512xf32>
    %22 = arith.truncf %21 : vector<64x512xf32> to vector<64x512xbf16>
    %23 = vector.extract_strided_slice %22 {offsets = [0, 0], sizes = [64, 384], strides = [1, 1]} : vector<64x512xbf16> to vector<64x384xbf16>
    %24 = vector.extract_strided_slice %22 {offsets = [0, 1], sizes = [64, 384], strides = [1, 1]} : vector<64x512xbf16> to vector<64x384xbf16>
    %25 = vector.extract_strided_slice %22 {offsets = [0, 2], sizes = [64, 384], strides = [1, 1]} : vector<64x512xbf16> to vector<64x384xbf16>
    %26 = vector.extract_strided_slice %22 {offsets = [0, 18], sizes = [64, 384], strides = [1, 1]} : vector<64x512xbf16> to vector<64x384xbf16>
    %27 = vector.extract_strided_slice %22 {offsets = [0, 19], sizes = [64, 384], strides = [1, 1]} : vector<64x512xbf16> to vector<64x384xbf16>
    %28 = vector.extract_strided_slice %22 {offsets = [0, 20], sizes = [64, 384], strides = [1, 1]} : vector<64x512xbf16> to vector<64x384xbf16>
    %29 = vector.extract_strided_slice %22 {offsets = [0, 36], sizes = [64, 384], strides = [1, 1]} : vector<64x512xbf16> to vector<64x384xbf16>
    %30 = vector.extract_strided_slice %22 {offsets = [0, 37], sizes = [64, 384], strides = [1, 1]} : vector<64x512xbf16> to vector<64x384xbf16>
    %31 = vector.extract_strided_slice %22 {offsets = [0, 38], sizes = [64, 384], strides = [1, 1]} : vector<64x512xbf16> to vector<64x384xbf16>
    %32 = tpu.concatenate %23, %24, %25, %26, %27, %28, %29, %30, %31 in 0 : vector<64x384xbf16>, vector<64x384xbf16>, vector<64x384xbf16>, vector<64x384xbf16>, vector<64x384xbf16>, vector<64x384xbf16>, vector<64x384xbf16>, vector<64x384xbf16>, vector<64x384xbf16> -> vector<576x384xbf16>
    %c0_9 = arith.constant 0 : index
    %c0_10 = arith.constant 0 : index
    %33 = vector.load %arg5[%c0_9, %c0_10] : memref<8x576xbf16, #tpu.memory_space<vmem>>, vector<8x576xbf16>
    %cst_11 = arith.constant dense<0.000000e+00> : vector<8x384xf32>
    %34 = tpu.matmul %33, %32, %cst_11 {dimension_numbers = #tpu.dot_dimension_numbers<[1], [0], [0], [1], [0, 0, 1, 1], [], []>} : vector<8x576xbf16>, vector<576x384xbf16>, vector<8x384xf32> -> vector<8x384xf32>
    %c0_12 = arith.constant 0 : index
    %c0_13 = arith.constant 0 : index
    %35 = vector.load %arg6[%c0_12, %c0_13] : memref<8x1xf32, #tpu.memory_space<vmem>>, vector<8x1xf32>
    %36 = vector.broadcast %35 : vector<8x1xf32> to vector<8x384xf32>
    %37 = arith.addf %34, %36 : vector<8x384xf32>
    %c0_14 = arith.constant 0 : index
    %c0_15 = arith.constant 0 : index
    %c0_16 = arith.constant 0 : index
    %38 = vector.load %arg7[%c0_14, %c0_15, %c0_16] : memref<1x8x384xf32, #tpu.memory_space<vmem>>, vector<1x8x384xf32>
    %39 = vector.shape_cast %38 : vector<1x8x384xf32> to vector<8x384xf32>
    %40 = vector.shape_cast %37 : vector<8x384xf32> to vector<1x8x384xf32>
    tpu.vector_store %arg7[%c0_14, %c0_15, %c0_16], %40 {strides = array<i32>} : memref<1x8x384xf32, #tpu.memory_space<vmem>>, vector<1x8x384xf32>,
    return
  }
  func.func @transform_0(%arg0: i32) -> (i32, i32, i32) {
    %c0_i32 = arith.constant 0 : i32
    %c0_i32_0 = arith.constant 0 : i32
    %c0_i32_1 = arith.constant 0 : i32
    return %arg0, %c0_i32, %c0_i32_0 : i32, i32, i32
  }
  func.func @transform_1(%arg0: i32) -> (i32, i32) {
    %c0_i32 = arith.constant 0 : i32
    %c0_i32_0 = arith.constant 0 : i32
    %c0_i32_1 = arith.constant 0 : i32
    return %c0_i32, %c0_i32_0 : i32, i32
  }
  func.func @transform_2(%arg0: i32) -> (i32, i32) {
    %c0_i32 = arith.constant 0 : i32
    %c0_i32_0 = arith.constant 0 : i32
    %c0_i32_1 = arith.constant 0 : i32
    return %c0_i32, %c0_i32_0 : i32, i32
  }
  func.func @transform_3(%arg0: i32) -> (i32, i32) {
    %c0_i32 = arith.constant 0 : i32
    %c0_i32_0 = arith.constant 0 : i32
    %c0_i32_1 = arith.constant 0 : i32
    return %c0_i32, %c0_i32_0 : i32, i32
  }
  func.func @transform_4(%arg0: i32) -> (i32, i32) {
    %c0_i32 = arith.constant 0 : i32
    %c0_i32_0 = arith.constant 0 : i32
    %c0_i32_1 = arith.constant 0 : i32
    return %c0_i32, %c0_i32_0 : i32, i32
  }
  func.func @transform_5(%arg0: i32) -> (i32, i32) {
    %c0_i32 = arith.constant 0 : i32
    %c0_i32_0 = arith.constant 0 : i32
    %c0_i32_1 = arith.constant 0 : i32
    return %c0_i32, %c0_i32_0 : i32, i32
  }
  func.func @transform_6(%arg0: i32) -> (i32, i32, i32) {
    %c0_i32 = arith.constant 0 : i32
    %c0_i32_0 = arith.constant 0 : i32
    %c0_i32_1 = arith.constant 0 : i32
    return %arg0, %c0_i32, %c0_i32_0 : i32, i32, i32
  }
}

</mosaic_0001>

<llo_original>
// kernel: tpu_custom_call.1
$region0: #{tpu_custom_call.1}
  #allocation0 [shape = 'u32[]', space=smem, size = 0x4, offset = 0x4, fixed_abs, tag = 'smem constant byte address 0x4 - core index']
  #allocation1 [shape = 'u32[144,128]{1,0:T(1,128)}', space=vmem, size = 0x12000, scoped, tag = 'internal scratch']
  %s0 = inlined_call_operand.hbm [shape: bf16[2,32,550], index: 0, kind: input, shape index: {}]
  %s1 = inlined_call_operand.vmem [shape: f32[1,512], index: 1, kind: input, shape index: {}]
  %s2 = inlined_call_operand.hbm [shape: bf16[64,288], index: 2, kind: input, shape index: {}]
  %s3 = inlined_call_operand.vmem [shape: f32[64,1], index: 3, kind: input, shape index: {}]
  %s4 = inlined_call_operand.vmem [shape: bf16[8,576], index: 4, kind: input, shape index: {}]
  %s5 = inlined_call_operand.vmem [shape: f32[8,1], index: 5, kind: input, shape index: {}]
  %s6 = inlined_call_operand.hbm [shape: f32[2,8,384], index: 6, kind: output, shape index: {}]
  %s7 = sld [smem:[#allocation0]]
  $region65: #{tpu_custom_call.1} parent=0
    _
  %s9 = ssub.s32 1, %s7
  %s10 = scalar_select 0, %s9, %s7
  $region1: #{tpu_custom_call.1} parent=0
    #allocation2 [shape = 'u8[81920]{0}', space=vmem, size = 0x14000, scoped, tag = 'input window, operand 0']
    #allocation3 [shape = 's32[2]{0}', space=sflag, size = 0x8, scoped, tag = 'scoped memory for tpu_custom_call.1']
    #allocation4 [shape = 's32[2]{0}', space=sflag, size = 0x8, scoped, tag = 'scoped memory for tpu_custom_call.1']
    #allocation5 [shape = 'u8[49152]{0}', space=vmem, size = 0xc000, scoped, tag = 'input window, operand 2, single buffered']
    #allocation6 [shape = 's32[1]{0}', space=sflag, size = 0x4, scoped, tag = 'scoped memory for tpu_custom_call.1']
    #allocation7 [shape = 'u8[24576]{0}', space=vmem, size = 0x6000, scoped, tag = 'output window, operand 0']
    %11 = vsyncpa [#allocation3], 0
    %s12 = scalar_lea.sflag [#allocation3], 1
    %13 = vsyncpa %s12, 0
    %14 = vsyncpa [#allocation6], 0
    %15 = vsyncpa [#allocation4], 0
    %s16 = scalar_lea.sflag [#allocation4], 1
    %17 = vsyncpa %s16, 0
    loop: start=0, step=1, limit=4
    $region2: #{tpu_custom_call.1} parent=1 // loop_pre_header
      _
    $region3: #{tpu_custom_call.1} parent=1 // loop_header
      %s19 = sphi 0, %s23
      %p20 = scmp.ge.s32.totalorder %s19, 4
      %s29 = sphi 0, %s31
      %s32 = sphi 0, %s29
      %s33 = sphi 0, %s32
      %s49 = sphi 0, %s33
      %s53 = sphi 0, %s53
      %s55 = sphi 0, %s53
      %s56 = sphi 0, %s55
      %s70 = sphi 0, %s56
      %s74 = sphi 0, %s74
      %s76 = sphi 0, %s74
      %s77 = sphi 0, %s76
      %s91 = sphi 0, %s77
      %s95 = sphi 0, %s95
      %s97 = sphi 0, %s95
      %s98 = sphi 0, %s97
      %s112 = sphi 0, %s98
      %s116 = sphi 0, %s116
      %s118 = sphi 0, %s116
      %s119 = sphi 0, %s118
      %s133 = sphi 0, %s119
      %s137 = sphi 0, %s137
      %s139 = sphi 0, %s137
      %s140 = sphi 0, %s139
      %s154 = sphi 0, %s140
      %s160 = sphi 0, %s162
      %s163 = sphi 0, %s160
      %s164 = sphi 0, %s163
      %s180 = sphi 0, %s164
    $region4: #{tpu_custom_call.1} parent=1 // loop_header_branch
      %22 = sbr.rel (%p20) target = $region8
    $region5: #{tpu_custom_call.1} parent=1 // loop_body
      %s24 = ssub.s32 %s19, 1
      %s25 = ssub.s32 %s19, 2
      %s26 = sadd.s32 %s19, 1
      %s27 = ssub.s32 %s19, %s26
      %p28 = scmp.eq.s32.totalorder %s27, 0
      %s30 = sadd.s32 %s29, 1
      %s31 = scalar_select %p28, %s29, %s30
      %p34 = pneg %p28
      %p35 = scmp.eq.s32.totalorder %s19, 1
      %p36 = por %p34, %p35
      %p37 = scmp.ne.s32.totalorder %s29, %s32
      %p38 = scmp.eq.s32.totalorder %s19, 0
      %p39 = por %p37, %p38
      %p40 = scmp.ne.s32.totalorder %s29, %s32
      %p41 = scmp.eq.s32.totalorder %s24, 1
      %p42 = por %p40, %p41
      %p43 = scmp.ne.s32.totalorder %s32, %s33
      %p44 = scmp.eq.s32.totalorder %s24, 0
      %p45 = por %p43, %p44
      %p46 = scmp.ne.s32.totalorder %s32, %s33
      %p47 = scmp.eq.s32.totalorder %s25, 1
      %p48 = por %p46, %p47
      %p50 = scmp.ne.s32.totalorder %s33, %s49
      %p51 = scmp.eq.s32.totalorder %s25, 0
      %p52 = por %p50, %p51
      %s54 = sadd.s32 %s53, 1
      %p57 = scmp.eq.s32.totalorder %s19, 1
      %p58 = scmp.ne.s32.totalorder %s53, %s55
      %p59 = scmp.eq.s32.totalorder %s19, 0
      %p60 = por %p58, %p59
      %p61 = scmp.ne.s32.totalorder %s53, %s55
      %p62 = scmp.eq.s32.totalorder %s24, 1
      %p63 = por %p61, %p62
      %p64 = scmp.ne.s32.totalorder %s55, %s56
      %p65 = scmp.eq.s32.totalorder %s24, 0
      %p66 = por %p64, %p65
      %p67 = scmp.ne.s32.totalorder %s55, %s56
      %p68 = scmp.eq.s32.totalorder %s25, 1
      %p69 = por %p67, %p68
      %p71 = scmp.ne.s32.totalorder %s56, %s70
      %p72 = scmp.eq.s32.totalorder %s25, 0
      %p73 = por %p71, %p72
      %s75 = sadd.s32 %s74, 1
      %p78 = scmp.eq.s32.totalorder %s19, 1
      %p79 = scmp.ne.s32.totalorder %s74, %s76
      %p80 = scmp.eq.s32.totalorder %s19, 0
      %p81 = por %p79, %p80
      %p82 = scmp.ne.s32.totalorder %s74, %s76
      %p83 = scmp.eq.s32.totalorder %s24, 1
      %p84 = por %p82, %p83
      %p85 = scmp.ne.s32.totalorder %s76, %s77
      %p86 = scmp.eq.s32.totalorder %s24, 0
      %p87 = por %p85, %p86
      %p88 = scmp.ne.s32.totalorder %s76, %s77
      %p89 = scmp.eq.s32.totalorder %s25, 1
      %p90 = por %p88, %p89
      %p92 = scmp.ne.s32.totalorder %s77, %s91
      %p93 = scmp.eq.s32.totalorder %s25, 0
      %p94 = por %p92, %p93
      %s96 = sadd.s32 %s95, 1
      %p99 = scmp.eq.s32.totalorder %s19, 1
      %p100 = scmp.ne.s32.totalorder %s95, %s97
      %p101 = scmp.eq.s32.totalorder %s19, 0
      %p102 = por %p100, %p101
      %p103 = scmp.ne.s32.totalorder %s95, %s97
      %p104 = scmp.eq.s32.totalorder %s24, 1
      %p105 = por %p103, %p104
      %p106 = scmp.ne.s32.totalorder %s97, %s98
      %p107 = scmp.eq.s32.totalorder %s24, 0
      %p108 = por %p106, %p107
      %p109 = scmp.ne.s32.totalorder %s97, %s98
      %p110 = scmp.eq.s32.totalorder %s25, 1
      %p111 = por %p109, %p110
      %p113 = scmp.ne.s32.totalorder %s98, %s112
      %p114 = scmp.eq.s32.totalorder %s25, 0
      %p115 = por %p113, %p114
      %s117 = sadd.s32 %s116, 1
      %p120 = scmp.eq.s32.totalorder %s19, 1
      %p121 = scmp.ne.s32.totalorder %s116, %s118
      %p122 = scmp.eq.s32.totalorder %s19, 0
      %p123 = por %p121, %p122
      %p124 = scmp.ne.s32.totalorder %s116, %s118
      %p125 = scmp.eq.s32.totalorder %s24, 1
      %p126 = por %p124, %p125
      %p127 = scmp.ne.s32.totalorder %s118, %s119
      %p128 = scmp.eq.s32.totalorder %s24, 0
      %p129 = por %p127, %p128
      %p130 = scmp.ne.s32.totalorder %s118, %s119
      %p131 = scmp.eq.s32.totalorder %s25, 1
      %p132 = por %p130, %p131
      %p134 = scmp.ne.s32.totalorder %s119, %s133
      %p135 = scmp.eq.s32.totalorder %s25, 0
      %p136 = por %p134, %p135
      %s138 = sadd.s32 %s137, 1
      %p141 = scmp.eq.s32.totalorder %s19, 1
      %p142 = scmp.ne.s32.totalorder %s137, %s139
      %p143 = scmp.eq.s32.totalorder %s19, 0
      %p144 = por %p142, %p143
      %p145 = scmp.ne.s32.totalorder %s137, %s139
      %p146 = scmp.eq.s32.totalorder %s24, 1
      %p147 = por %p145, %p146
      %p148 = scmp.ne.s32.totalorder %s139, %s140
      %p149 = scmp.eq.s32.totalorder %s24, 0
      %p150 = por %p148, %p149
      %p151 = scmp.ne.s32.totalorder %s139, %s140
      %p152 = scmp.eq.s32.totalorder %s25, 1
      %p153 = por %p151, %p152
      %p155 = scmp.ne.s32.totalorder %s140, %s154
      %p156 = scmp.eq.s32.totalorder %s25, 0
      %p157 = por %p155, %p156
      %s158 = ssub.s32 %s19, %s26
      %p159 = scmp.eq.s32.totalorder %s158, 0
      %s161 = sadd.s32 %s160, 1
      %s162 = scalar_select %p159, %s160, %s161
      %p165 = pneg %p159
      %p166 = scmp.eq.s32.totalorder %s19, 1
      %p167 = por %p165, %p166
      %p168 = scmp.ne.s32.totalorder %s160, %s163
      %p169 = scmp.eq.s32.totalorder %s19, 0
      %p170 = por %p168, %p169
      %p171 = scmp.ne.s32.totalorder %s160, %s163
      %p172 = scmp.eq.s32.totalorder %s24, 1
      %p173 = por %p171, %p172
      %p174 = scmp.ne.s32.totalorder %s163, %s164
      %p175 = scmp.eq.s32.totalorder %s24, 0
      %p176 = por %p174, %p175
      %p177 = scmp.ne.s32.totalorder %s163, %s164
      %p178 = scmp.eq.s32.totalorder %s25, 1
      %p179 = por %p177, %p178
      %p181 = scmp.ne.s32.totalorder %s164, %s180
      %p182 = scmp.eq.s32.totalorder %s25, 0
      %p183 = por %p181, %p182
      %p184 = scmp.le.s32.totalorder 1, %s19
      %p185 = scmp.lt.s32.totalorder %s19, 3
      %p186 = pnand %p184, %p185
      %p187 = pneg %p186
      // Predicated region
      $region9: #{tpu_custom_call.1} parent=5 // pred_check
        _
      $region10: #{tpu_custom_call.1} parent=5 // pred_check_branch
        %189 = sbr.rel (%p186) target = $region12
      $region11: #{tpu_custom_call.1} parent=5 // pred_region
        %s190 = ssub.s32 %s19, 1
        // Predicated region
        $region13: #{tpu_custom_call.1} parent=11 // pred_check
          %p191 = pneg %p66
        $region14: #{tpu_custom_call.1} parent=11 // pred_check_branch
          %193 = sbr.rel (%p191) target = $region16
        $region15: #{tpu_custom_call.1} parent=11 // pred_region
          _
        $region16: #{tpu_custom_call.1} parent=11 // pred_fallthru
          _
        // Predicated region
        $region17: #{tpu_custom_call.1} parent=11 // pred_check
          %p194 = pneg %p87
        $region18: #{tpu_custom_call.1} parent=11 // pred_check_branch
          %196 = sbr.rel (%p194) target = $region20
        $region19: #{tpu_custom_call.1} parent=11 // pred_region
          %s198 = ssub.s32 1536, 1536
          %199 = vsyncadd [#allocation6], %s198
          %s200 = sshll.u32 [#allocation5], 4
          %s201 = int_to_ptr.vmem [resolvable:$true] %s200
          %206 = dma.hbm_to_vmem [thread:$0]  %s2, 1536, %s201, [#allocation6], 192, 192, 12
        $region20: #{tpu_custom_call.1} parent=11 // pred_fallthru
          _
        // Predicated region
        $region21: #{tpu_custom_call.1} parent=11 // pred_check
          %p207 = pneg %p108
        $region22: #{tpu_custom_call.1} parent=11 // pred_check_branch
          %209 = sbr.rel (%p207) target = $region24
        $region23: #{tpu_custom_call.1} parent=11 // pred_region
          _
        $region24: #{tpu_custom_call.1} parent=11 // pred_fallthru
          _
        // Predicated region
        $region25: #{tpu_custom_call.1} parent=11 // pred_check
          %p210 = pneg %p129
        $region26: #{tpu_custom_call.1} parent=11 // pred_check_branch
          %212 = sbr.rel (%p210) target = $region28
        $region27: #{tpu_custom_call.1} parent=11 // pred_region
          _
        $region28: #{tpu_custom_call.1} parent=11 // pred_fallthru
          _
        // Predicated region
        $region29: #{tpu_custom_call.1} parent=11 // pred_check
          %p213 = pneg %p150
        $region30: #{tpu_custom_call.1} parent=11 // pred_check_branch
          %215 = sbr.rel (%p213) target = $region32
        $region31: #{tpu_custom_call.1} parent=11 // pred_region
          _
        $region32: #{tpu_custom_call.1} parent=11 // pred_fallthru
          _
      $region12: #{tpu_custom_call.1} parent=5 // pred_fallthru
        _
      %p216 = scmp.lt.s32.totalorder %s19, 2
      // Predicated region
      $region33: #{tpu_custom_call.1} parent=5 // pred_check
        %p217 = pneg %p216
      $region34: #{tpu_custom_call.1} parent=5 // pred_check_branch
        %219 = sbr.rel (%p217) target = $region36
      $region35: #{tpu_custom_call.1} parent=5 // pred_region
        // Predicated region
        $region37: #{tpu_custom_call.1} parent=35 // pred_check
          %p220 = pneg %p39
        $region38: #{tpu_custom_call.1} parent=35 // pred_check_branch
          %222 = sbr.rel (%p220) target = $region40
        $region39: #{tpu_custom_call.1} parent=35 // pred_region
          %s223 = sand.u32 %s29, 1
          %s224 = scalar_lea.sflag [#allocation3], %s223
          %s225 = sand.u32 %s29, 1
          %s226 = smul.addr %s225, 80
          %s227 = scalar_lea.vmem [#allocation2], %s226
          %s229 = ssub.s32 1280, 1280
          %230 = vsyncadd %s224, %s229
          %s231 = smul.addr %s19, 20
          %s232 = smul.addr %s231, 64
          %s233 = scalar_lea.hbm %s0, %s232
          %s234 = sshll.u32 %s227, 4
          %s235 = int_to_ptr.vmem [resolvable:$true] %s234
          %240 = dma.hbm_to_vmem [thread:$0]  %s233, 1280, %s235, %s224, 320, 320, 20
        $region40: #{tpu_custom_call.1} parent=35 // pred_fallthru
          _
      $region36: #{tpu_custom_call.1} parent=5 // pred_fallthru
        _
      %p241 = scmp.le.s32.totalorder 1, %s19
      %p242 = scmp.lt.s32.totalorder %s19, 3
      %p243 = pnand %p241, %p242
      %p244 = pneg %p243
      // Predicated region
      $region41: #{tpu_custom_call.1} parent=5 // pred_check
        _
      $region42: #{tpu_custom_call.1} parent=5 // pred_check_branch
        %246 = sbr.rel (%p243) target = $region44
      $region43: #{tpu_custom_call.1} parent=5 // pred_region
        %s247 = ssub.s32 %s19, 1
        %s248 = sand.u32 %s32, 1
        %s249 = scalar_lea.sflag [#allocation3], %s248
        %s250 = sand.u32 %s32, 1
        %s251 = smul.addr %s250, 80
        %s252 = scalar_lea.vmem [#allocation2], %s251
        // Predicated region
        $region45: #{tpu_custom_call.1} parent=43 // pred_check
          %p253 = pneg %p45
        $region46: #{tpu_custom_call.1} parent=43 // pred_check_branch
          %255 = sbr.rel (%p253) target = $region48
        $region47: #{tpu_custom_call.1} parent=43 // pred_region
          %256 = dma.done %s249, 1280
        $region48: #{tpu_custom_call.1} parent=43 // pred_fallthru
          _
        // Predicated region
        $region49: #{tpu_custom_call.1} parent=43 // pred_check
          %p257 = pneg %p87
        $region50: #{tpu_custom_call.1} parent=43 // pred_check_branch
          %259 = sbr.rel (%p257) target = $region52
        $region51: #{tpu_custom_call.1} parent=43 // pred_region
          %260 = dma.done [#allocation6], 1536
        $region52: #{tpu_custom_call.1} parent=43 // pred_fallthru
          _
        %s261 = sand.u32 %s32, 1
        %s262 = scalar_lea.sflag [#allocation3], %s261
        %s263 = sand.u32 %s32, 1
        %s264 = smul.addr %s263, 80
        %s265 = scalar_lea.vmem [#allocation2], %s264
        %p266 = pneg %p45
        %p267 = pneg %p42
        %p268 = pneg %p66
        %p269 = pneg %p63
        %p270 = pneg %p87
        %p271 = pneg %p84
        %p272 = pneg %p108
        %p273 = pneg %p105
        %p274 = pneg %p129
        %p275 = pneg %p126
        %p276 = pneg %p150
        %p277 = pneg %p147
        %p278 = pneg %p176
        %p279 = pneg %p173
        %s280 = sand.u32 %s163, 1
        %s281 = scalar_lea.sflag [#allocation4], %s280
        %s282 = sand.u32 %s163, 1
        %s283 = smul.addr %s282, 24
        %s284 = scalar_lea.vmem [#allocation7], %s283
        %v286 = vld [vmem:[%s252] sm:$0xff]
        %v287 = vld [vmem:[%s252 + $0x8] sm:$0xff]
        %v288 = vld [vmem:[%s252 + $0x10] sm:$0xf]
        %v289 = vld [vmem:[%s252 + $0x14] sm:$0xff]
        %v290 = vld [vmem:[%s252 + $0x1c] sm:$0xff]
        %v291 = vld [vmem:[%s252 + $0x24] sm:$0xf]
        %v292 = vld [vmem:[%s252 + $0x28] sm:$0xff]
        %v293 = vld [vmem:[%s252 + $0x30] sm:$0xff]
        %v294 = vld [vmem:[%s252 + $0x38] sm:$0xf]
        %v295 = vld [vmem:[%s252 + $0x3c] sm:$0xff]
        %v296 = vld [vmem:[%s252 + $0x44] sm:$0xff]
        %v297 = vld [vmem:[%s252 + $0x4c] sm:$0xf]
        %v306 = vunpack.c.l.b16 %v286
        %v307 = vunpack.c.h.b16 %v286
        %v308 = vunpack.c.l.b16 %v287
        %v309 = vunpack.c.h.b16 %v287
        %v310 = vunpack.c.l.b16 %v289
        %v311 = vunpack.c.h.b16 %v289
        %v312 = vunpack.c.l.b16 %v290
        %v313 = vunpack.c.h.b16 %v290
        %v314 = vunpack.c.l.b16 %v292
        %v315 = vunpack.c.h.b16 %v292
        %v316 = vunpack.c.l.b16 %v293
        %v317 = vunpack.c.h.b16 %v293
        %v318 = vunpack.c.l.b16 %v295
        %v319 = vunpack.c.h.b16 %v295
        %v320 = vunpack.c.l.b16 %v296
        %v321 = vunpack.c.h.b16 %v296
        %v322 = vpack.c.b16 %v310, %v306
        %v323 = vpack.c.b16 %v311, %v307
        %v324 = vpack.c.b16 %v312, %v308
        %v325 = vpack.c.b16 %v313, %v309
        %v326 = vpack.c.b16 %v318, %v314
        %v327 = vpack.c.b16 %v319, %v315
        %v328 = vpack.c.b16 %v320, %v316
        %v329 = vpack.c.b16 %v321, %v317
        %v342 = vunpack.c.l.b16 %v288
        %v343 = vunpack.c.l.b16 %v291
        %v344 = vunpack.c.l.b16 %v294
        %v345 = vunpack.c.l.b16 %v297
        %v346 = vpack.c.b16 %v343, %v342
        %v347 = vpack.c.b16 %v345, %v344
        %348 = vrot.lane.b32.xlu0 %v322, 127
        %v349 = vpop.permute.xlu0 %348
        %350 = vrot.lane.b32.xlu0 %v323, 127
        %v351 = vpop.permute.xlu0 %350
        %352 = vrot.lane.b32.xlu0 %v324, 127
        %v353 = vpop.permute.xlu0 %352
        %354 = vrot.lane.b32.xlu0 %v325, 127
        %v355 = vpop.permute.xlu0 %354
        %356 = vrot.lane.b32.xlu0 %v346, 127
        %v357 = vpop.permute.xlu0 %356
        %358 = vrot.lane.b32.xlu0 %v326, 127
        %v359 = vpop.permute.xlu0 %358
        %360 = vrot.lane.b32.xlu0 %v327, 127
        %v361 = vpop.permute.xlu0 %360
        %362 = vrot.lane.b32.xlu0 %v328, 127
        %v363 = vpop.permute.xlu0 %362
        %364 = vrot.lane.b32.xlu0 %v329, 127
        %v365 = vpop.permute.xlu0 %364
        %366 = vrot.lane.b32.xlu0 %v347, 127
        %v367 = vpop.permute.xlu0 %366
        %vm368 = vcmask 1039360
        %v369 = vsel %vm368, %v349, %v351
        %v370 = vsel %vm368, %v351, %v353
        %v371 = vsel %vm368, %v353, %v355
        %v372 = vsel %vm368, %v355, %v357
        %v373 = vsel %vm368, %v359, %v361
        %v374 = vsel %vm368, %v361, %v363
        %v375 = vsel %vm368, %v363, %v365
        %v376 = vsel %vm368, %v365, %v367
        %385 = vrot.lane.b32.xlu0 %v322, 126
        %v386 = vpop.permute.xlu0 %385
        %387 = vrot.lane.b32.xlu0 %v323, 126
        %v388 = vpop.permute.xlu0 %387
        %389 = vrot.lane.b32.xlu0 %v324, 126
        %v390 = vpop.permute.xlu0 %389
        %391 = vrot.lane.b32.xlu0 %v325, 126
        %v392 = vpop.permute.xlu0 %391
        %393 = vrot.lane.b32.xlu0 %v346, 126
        %v394 = vpop.permute.xlu0 %393
        %395 = vrot.lane.b32.xlu0 %v326, 126
        %v396 = vpop.permute.xlu0 %395
        %397 = vrot.lane.b32.xlu0 %v327, 126
        %v398 = vpop.permute.xlu0 %397
        %399 = vrot.lane.b32.xlu0 %v328, 126
        %v400 = vpop.permute.xlu0 %399
        %401 = vrot.lane.b32.xlu0 %v329, 126
        %v402 = vpop.permute.xlu0 %401
        %403 = vrot.lane.b32.xlu0 %v347, 126
        %v404 = vpop.permute.xlu0 %403
        %vm405 = vcmask 1031168
        %v406 = vsel %vm405, %v386, %v388
        %v407 = vsel %vm405, %v388, %v390
        %v408 = vsel %vm405, %v390, %v392
        %v409 = vsel %vm405, %v392, %v394
        %v410 = vsel %vm405, %v396, %v398
        %v411 = vsel %vm405, %v398, %v400
        %v412 = vsel %vm405, %v400, %v402
        %v413 = vsel %vm405, %v402, %v404
        %422 = vrot.lane.b32.xlu0 %v322, 110
        %v423 = vpop.permute.xlu0 %422
        %424 = vrot.lane.b32.xlu0 %v323, 110
        %v425 = vpop.permute.xlu0 %424
        %426 = vrot.lane.b32.xlu0 %v324, 110
        %v427 = vpop.permute.xlu0 %426
        %428 = vrot.lane.b32.xlu0 %v325, 110
        %v429 = vpop.permute.xlu0 %428
        %430 = vrot.lane.b32.xlu0 %v346, 110
        %v431 = vpop.permute.xlu0 %430
        %432 = vrot.lane.b32.xlu0 %v326, 110
        %v433 = vpop.permute.xlu0 %432
        %434 = vrot.lane.b32.xlu0 %v327, 110
        %v435 = vpop.permute.xlu0 %434
        %436 = vrot.lane.b32.xlu0 %v328, 110
        %v437 = vpop.permute.xlu0 %436
        %438 = vrot.lane.b32.xlu0 %v329, 110
        %v439 = vpop.permute.xlu0 %438
        %440 = vrot.lane.b32.xlu0 %v347, 110
        %v441 = vpop.permute.xlu0 %440
        %vm442 = vcmask 900096
        %v443 = vsel %vm442, %v423, %v425
        %v444 = vsel %vm442, %v425, %v427
        %v445 = vsel %vm442, %v427, %v429
        %v446 = vsel %vm442, %v429, %v431
        %v447 = vsel %vm442, %v433, %v435
        %v448 = vsel %vm442, %v435, %v437
        %v449 = vsel %vm442, %v437, %v439
        %v450 = vsel %vm442, %v439, %v441
        %459 = vrot.lane.b32.xlu0 %v322, 109
        %v460 = vpop.permute.xlu0 %459
        %461 = vrot.lane.b32.xlu0 %v323, 109
        %v462 = vpop.permute.xlu0 %461
        %463 = vrot.lane.b32.xlu0 %v324, 109
        %v464 = vpop.permute.xlu0 %463
        %465 = vrot.lane.b32.xlu0 %v325, 109
        %v466 = vpop.permute.xlu0 %465
        %467 = vrot.lane.b32.xlu0 %v346, 109
        %v468 = vpop.permute.xlu0 %467
        %469 = vrot.lane.b32.xlu0 %v326, 109
        %v470 = vpop.permute.xlu0 %469
        %471 = vrot.lane.b32.xlu0 %v327, 109
        %v472 = vpop.permute.xlu0 %471
        %473 = vrot.lane.b32.xlu0 %v328, 109
        %v474 = vpop.permute.xlu0 %473
        %475 = vrot.lane.b32.xlu0 %v329, 109
        %v476 = vpop.permute.xlu0 %475
        %477 = vrot.lane.b32.xlu0 %v347, 109
        %v478 = vpop.permute.xlu0 %477
        %vm479 = vcmask 891904
        %v480 = vsel %vm479, %v460, %v462
        %v481 = vsel %vm479, %v462, %v464
        %v482 = vsel %vm479, %v464, %v466
        %v483 = vsel %vm479, %v466, %v468
        %v484 = vsel %vm479, %v470, %v472
        %v485 = vsel %vm479, %v472, %v474
        %v486 = vsel %vm479, %v474, %v476
        %v487 = vsel %vm479, %v476, %v478
        %496 = vrot.lane.b32.xlu0 %v322, 108
        %v497 = vpop.permute.xlu0 %496
        %498 = vrot.lane.b32.xlu0 %v323, 108
        %v499 = vpop.permute.xlu0 %498
        %500 = vrot.lane.b32.xlu0 %v324, 108
        %v501 = vpop.permute.xlu0 %500
        %502 = vrot.lane.b32.xlu0 %v325, 108
        %v503 = vpop.permute.xlu0 %502
        %504 = vrot.lane.b32.xlu0 %v346, 108
        %v505 = vpop.permute.xlu0 %504
        %506 = vrot.lane.b32.xlu0 %v326, 108
        %v507 = vpop.permute.xlu0 %506
        %508 = vrot.lane.b32.xlu0 %v327, 108
        %v509 = vpop.permute.xlu0 %508
        %510 = vrot.lane.b32.xlu0 %v328, 108
        %v511 = vpop.permute.xlu0 %510
        %512 = vrot.lane.b32.xlu0 %v329, 108
        %v513 = vpop.permute.xlu0 %512
        %514 = vrot.lane.b32.xlu0 %v347, 108
        %v515 = vpop.permute.xlu0 %514
        %vm516 = vcmask 883712
        %v517 = vsel %vm516, %v497, %v499
        %v518 = vsel %vm516, %v499, %v501
        %v519 = vsel %vm516, %v501, %v503
        %v520 = vsel %vm516, %v503, %v505
        %v521 = vsel %vm516, %v507, %v509
        %v522 = vsel %vm516, %v509, %v511
        %v523 = vsel %vm516, %v511, %v513
        %v524 = vsel %vm516, %v513, %v515
        %533 = vrot.lane.b32.xlu0 %v322, 92
        %v534 = vpop.permute.xlu0 %533
        %535 = vrot.lane.b32.xlu0 %v323, 92
        %v536 = vpop.permute.xlu0 %535
        %537 = vrot.lane.b32.xlu0 %v324, 92
        %v538 = vpop.permute.xlu0 %537
        %539 = vrot.lane.b32.xlu0 %v325, 92
        %v540 = vpop.permute.xlu0 %539
        %541 = vrot.lane.b32.xlu0 %v346, 92
        %v542 = vpop.permute.xlu0 %541
        %543 = vrot.lane.b32.xlu0 %v326, 92
        %v544 = vpop.permute.xlu0 %543
        %545 = vrot.lane.b32.xlu0 %v327, 92
        %v546 = vpop.permute.xlu0 %545
        %547 = vrot.lane.b32.xlu0 %v328, 92
        %v548 = vpop.permute.xlu0 %547
        %549 = vrot.lane.b32.xlu0 %v329, 92
        %v550 = vpop.permute.xlu0 %549
        %551 = vrot.lane.b32.xlu0 %v347, 92
        %v552 = vpop.permute.xlu0 %551
        %vm553 = vcmask 752640
        %v554 = vsel %vm553, %v534, %v536
        %v555 = vsel %vm553, %v536, %v538
        %v556 = vsel %vm553, %v538, %v540
        %v557 = vsel %vm553, %v540, %v542
        %v558 = vsel %vm553, %v544, %v546
        %v559 = vsel %vm553, %v546, %v548
        %v560 = vsel %vm553, %v548, %v550
        %v561 = vsel %vm553, %v550, %v552
        %570 = vrot.lane.b32.xlu0 %v322, 91
        %v571 = vpop.permute.xlu0 %570
        %572 = vrot.lane.b32.xlu0 %v323, 91
        %v573 = vpop.permute.xlu0 %572
        %574 = vrot.lane.b32.xlu0 %v324, 91
        %v575 = vpop.permute.xlu0 %574
        %576 = vrot.lane.b32.xlu0 %v325, 91
        %v577 = vpop.permute.xlu0 %576
        %578 = vrot.lane.b32.xlu0 %v346, 91
        %v579 = vpop.permute.xlu0 %578
        %580 = vrot.lane.b32.xlu0 %v326, 91
        %v581 = vpop.permute.xlu0 %580
        %582 = vrot.lane.b32.xlu0 %v327, 91
        %v583 = vpop.permute.xlu0 %582
        %584 = vrot.lane.b32.xlu0 %v328, 91
        %v585 = vpop.permute.xlu0 %584
        %586 = vrot.lane.b32.xlu0 %v329, 91
        %v587 = vpop.permute.xlu0 %586
        %588 = vrot.lane.b32.xlu0 %v347, 91
        %v589 = vpop.permute.xlu0 %588
        %vm590 = vcmask 744448
        %v591 = vsel %vm590, %v571, %v573
        %v592 = vsel %vm590, %v573, %v575
        %v593 = vsel %vm590, %v575, %v577
        %v594 = vsel %vm590, %v577, %v579
        %v595 = vsel %vm590, %v581, %v583
        %v596 = vsel %vm590, %v583, %v585
        %v597 = vsel %vm590, %v585, %v587
        %v598 = vsel %vm590, %v587, %v589
        %607 = vrot.lane.b32.xlu0 %v322, 90
        %v608 = vpop.permute.xlu0 %607
        %609 = vrot.lane.b32.xlu0 %v323, 90
        %v610 = vpop.permute.xlu0 %609
        %611 = vrot.lane.b32.xlu0 %v324, 90
        %v612 = vpop.permute.xlu0 %611
        %613 = vrot.lane.b32.xlu0 %v325, 90
        %v614 = vpop.permute.xlu0 %613
        %615 = vrot.lane.b32.xlu0 %v346, 90
        %v616 = vpop.permute.xlu0 %615
        %617 = vrot.lane.b32.xlu0 %v326, 90
        %v618 = vpop.permute.xlu0 %617
        %619 = vrot.lane.b32.xlu0 %v327, 90
        %v620 = vpop.permute.xlu0 %619
        %621 = vrot.lane.b32.xlu0 %v328, 90
        %v622 = vpop.permute.xlu0 %621
        %623 = vrot.lane.b32.xlu0 %v329, 90
        %v624 = vpop.permute.xlu0 %623
        %625 = vrot.lane.b32.xlu0 %v347, 90
        %v626 = vpop.permute.xlu0 %625
        %vm627 = vcmask 736256
        %v628 = vsel %vm627, %v608, %v610
        %v629 = vsel %vm627, %v610, %v612
        %v630 = vsel %vm627, %v612, %v614
        %v631 = vsel %vm627, %v614, %v616
        %v632 = vsel %vm627, %v618, %v620
        %v633 = vsel %vm627, %v620, %v622
        %v634 = vsel %vm627, %v622, %v624
        %v635 = vsel %vm627, %v624, %v626
        %v644 = vld [vmem:[#allocation5] sm:$0xff]
        %v645 = vld [vmem:[#allocation5 + $0x8] sm:$0xf]
        %v646 = vld [vmem:[#allocation5 + $0xc] sm:$0xff]
        %v647 = vld [vmem:[#allocation5 + $0x14] sm:$0xf]
        %v648 = vld [vmem:[#allocation5 + $0x18] sm:$0xff]
        %v649 = vld [vmem:[#allocation5 + $0x20] sm:$0xf]
        %v650 = vld [vmem:[#allocation5 + $0x24] sm:$0xff]
        %v651 = vld [vmem:[#allocation5 + $0x2c] sm:$0xf]
        %v652 = vld [vmem:[#allocation5 + $0x30] sm:$0xff]
        %v653 = vld [vmem:[#allocation5 + $0x38] sm:$0xf]
        %v654 = vld [vmem:[#allocation5 + $0x3c] sm:$0xff]
        %v655 = vld [vmem:[#allocation5 + $0x44] sm:$0xf]
        %v656 = vld [vmem:[#allocation5 + $0x48] sm:$0xff]
        %v657 = vld [vmem:[#allocation5 + $0x50] sm:$0xf]
        %v658 = vld [vmem:[#allocation5 + $0x54] sm:$0xff]
        %v659 = vld [vmem:[#allocation5 + $0x5c] sm:$0xf]
        %v660 = vld [vmem:[%s3] sm:$0xff]
        %v661 = vld [vmem:[%s3 + $0x8] sm:$0xff]
        %v662 = vld [vmem:[%s3 + $0x10] sm:$0xff]
        %v663 = vld [vmem:[%s3 + $0x18] sm:$0xff]
        %v664 = vld [vmem:[%s3 + $0x20] sm:$0xff]
        %v665 = vld [vmem:[%s3 + $0x28] sm:$0xff]
        %v666 = vld [vmem:[%s3 + $0x30] sm:$0xff]
        %v667 = vld [vmem:[%s3 + $0x38] sm:$0xff]
        %669 = vset.pattern.permute.xlu0 0
        %670 = vperm.xlu0 %669, %v660
        %v671 = vpop.permute.xlu0 %670
        %674 = vset.pattern.permute.xlu0 0
        %675 = vperm.xlu0 %674, %v661
        %v676 = vpop.permute.xlu0 %675
        %679 = vset.pattern.permute.xlu0 0
        %680 = vperm.xlu0 %679, %v662
        %v681 = vpop.permute.xlu0 %680
        %684 = vset.pattern.permute.xlu0 0
        %685 = vperm.xlu0 %684, %v663
        %v686 = vpop.permute.xlu0 %685
        %689 = vset.pattern.permute.xlu0 0
        %690 = vperm.xlu0 %689, %v664
        %v691 = vpop.permute.xlu0 %690
        %694 = vset.pattern.permute.xlu0 0
        %695 = vperm.xlu0 %694, %v665
        %v696 = vpop.permute.xlu0 %695
        %699 = vset.pattern.permute.xlu0 0
        %700 = vperm.xlu0 %699, %v666
        %v701 = vpop.permute.xlu0 %700
        %704 = vset.pattern.permute.xlu0 0
        %705 = vperm.xlu0 %704, %v667
        %v706 = vpop.permute.xlu0 %705
        %v724 = vunpack.c.l.b16 %v644
        %v725 = vunpack.c.h.b16 %v644
        %v726 = vunpack.c.l.b16 %v645
        %v727 = vunpack.c.l.b16 %v646
        %v728 = vunpack.c.h.b16 %v646
        %v729 = vunpack.c.l.b16 %v647
        %v730 = vunpack.c.l.b16 %v648
        %v731 = vunpack.c.h.b16 %v648
        %v732 = vunpack.c.l.b16 %v649
        %v733 = vunpack.c.l.b16 %v650
        %v734 = vunpack.c.h.b16 %v650
        %v735 = vunpack.c.l.b16 %v651
        %v736 = vunpack.c.l.b16 %v652
        %v737 = vunpack.c.h.b16 %v652
        %v738 = vunpack.c.l.b16 %v653
        %v739 = vunpack.c.l.b16 %v654
        %v740 = vunpack.c.h.b16 %v654
        %v741 = vunpack.c.l.b16 %v655
        %v742 = vunpack.c.l.b16 %v656
        %v743 = vunpack.c.h.b16 %v656
        %v744 = vunpack.c.l.b16 %v657
        %v745 = vunpack.c.l.b16 %v658
        %v746 = vunpack.c.h.b16 %v658
        %v747 = vunpack.c.l.b16 %v659
        %v748 = vpack.c.b16 %v727, %v724
        %v749 = vpack.c.b16 %v728, %v725
        %v750 = vpack.c.b16 %v729, %v726
        %v751 = vpack.c.b16 %v733, %v730
        %v752 = vpack.c.b16 %v734, %v731
        %v753 = vpack.c.b16 %v735, %v732
        %v754 = vpack.c.b16 %v739, %v736
        %v755 = vpack.c.b16 %v740, %v737
        %v756 = vpack.c.b16 %v741, %v738
        %v757 = vpack.c.b16 %v745, %v742
        %v758 = vpack.c.b16 %v746, %v743
        %v759 = vpack.c.b16 %v747, %v744
        %vm768 = vcmask 261120
        %v770 = vsel %vm768, %v750, 0
        %v773 = vsel %vm768, %v753, 0
        %v776 = vsel %vm768, %v756, 0
        %v779 = vsel %vm768, %v759, 0
        %781 = vmatprep.subr.bf16.mxu0 %v323
        %782 = vmatpush1.bf16.msra.mxu0 %v322
        %783 = vmatprep.subr.bf16.mxu0 %v327
        %784 = vmatpush1.bf16.msra.mxu0 %v326
        %785 = vmatprep.subr.bf16.mxu0 %v370
        %786 = vmatpush1.bf16.msra.mxu0 %v369
        %787 = vmatprep.subr.bf16.mxu0 %v374
        %788 = vmatpush1.bf16.msra.mxu0 %v373
        %789 = vmatprep.subr.bf16.mxu0 %v407
        %790 = vmatpush1.bf16.msra.mxu0 %v406
        %791 = vmatprep.subr.bf16.mxu0 %v411
        %792 = vmatpush1.bf16.msra.mxu0 %v410
        %793 = vmatprep.subr.bf16.mxu0 %v444
        %794 = vmatpush1.bf16.msra.mxu0 %v443
        %795 = vmatprep.subr.bf16.mxu0 %v448
        %796 = vmatpush1.bf16.msra.mxu0 %v447
        %797 = vmatprep.subr.bf16.mxu0 %v481
        %798 = vmatpush1.bf16.msra.mxu0 %v480
        %799 = vmatprep.subr.bf16.mxu0 %v485
        %800 = vmatpush1.bf16.msra.mxu0 %v484
        %801 = vmatprep.subr.bf16.mxu0 %v518
        %802 = vmatpush1.bf16.msra.mxu0 %v517
        %803 = vmatprep.subr.bf16.mxu0 %v522
        %804 = vmatpush1.bf16.msra.mxu0 %v521
        %805 = vmatprep.subr.bf16.mxu0 %v555
        %806 = vmatpush1.bf16.msra.mxu0 %v554
        %807 = vmatprep.subr.bf16.mxu0 %v559
        %808 = vmatpush1.bf16.msra.mxu0 %v558
        %809 = vmatprep.subr.bf16.mxu0 %v592
        %810 = vmatpush1.bf16.msra.mxu0 %v591
        %811 = vmatprep.subr.bf16.mxu0 %v596
        %812 = vmatpush1.bf16.msra.mxu0 %v595
        %813 = vmatprep.mubr.bf16.mxu0 %v749
        %814 = vmatmul.mubr.bf16.gmra.mrb[0].mxu0 %v748
        %v815 = vpop.f32.mrb[0].mxu0
        %v816 = vadd.f32 %v671, %v815
        %v817 = vpop.f32.mrb[0].mxu0
        %v818 = vadd.f32 %v671, %v817
        %v819 = vpop.f32.mrb[0].mxu0
        %v820 = vadd.f32 %v676, %v819
        %v821 = vpop.f32.mrb[0].mxu0
        %v822 = vadd.f32 %v676, %v821
        %823 = vmatprep.mubr.bf16.mxu0 %v752
        %824 = vmatmul.mubr.bf16.gmra.mrb[0].mxu0 %v751
        %v825 = vpop.f32.mrb[0].mxu0
        %v826 = vadd.f32 %v681, %v825
        %v827 = vpop.f32.mrb[0].mxu0
        %v828 = vadd.f32 %v681, %v827
        %v829 = vpop.f32.mrb[0].mxu0
        %v830 = vadd.f32 %v686, %v829
        %v831 = vpop.f32.mrb[0].mxu0
        %v832 = vadd.f32 %v686, %v831
        %833 = vmatprep.mubr.bf16.mxu0 %v755
        %834 = vmatmul.mubr.bf16.gmra.mrb[0].mxu0 %v754
        %v835 = vpop.f32.mrb[0].mxu0
        %v836 = vadd.f32 %v691, %v835
        %v837 = vpop.f32.mrb[0].mxu0
        %v838 = vadd.f32 %v691, %v837
        %v839 = vpop.f32.mrb[0].mxu0
        %v840 = vadd.f32 %v696, %v839
        %v841 = vpop.f32.mrb[0].mxu0
        %v842 = vadd.f32 %v696, %v841
        %843 = vmatprep.mubr.bf16.mxu0 %v758
        %844 = vmatmul.mubr.bf16.gmra.mrb[0].mxu0 %v757
        %v845 = vpop.f32.mrb[0].mxu0
        %v846 = vadd.f32 %v701, %v845
        %v847 = vpop.f32.mrb[0].mxu0
        %v848 = vadd.f32 %v701, %v847
        %v849 = vpop.f32.mrb[0].mxu0
        %v850 = vadd.f32 %v706, %v849
        %v851 = vpop.f32.mrb[0].mxu0
        %v852 = vadd.f32 %v706, %v851
        %853 = vdwg.mxu0
        %854 = vmatprep.subr.bf16.mxu0 %v629
        %855 = vmatpush1.bf16.msra.mxu0 %v628
        %856 = vmatprep.subr.bf16.mxu0 %v633
        %857 = vmatpush1.bf16.msra.mxu0 %v632
        %858 = vmatprep.subr.bf16.mxu0 0
        %859 = vmatpush1.bf16.msra.mxu0 0
        %860 = vmatprep.subr.bf16.mxu0 0
        %861 = vmatpush1.bf16.msra.mxu0 0
        %862 = vmatprep.subr.bf16.mxu0 0
        %863 = vmatpush1.bf16.msra.mxu0 0
        %864 = vmatprep.subr.bf16.mxu0 0
        %865 = vmatpush1.bf16.msra.mxu0 0
        %866 = vmatprep.subr.bf16.mxu0 0
        %867 = vmatpush1.bf16.msra.mxu0 0
        %868 = vmatprep.subr.bf16.mxu0 0
        %869 = vmatpush1.bf16.msra.mxu0 0
        %870 = vmatprep.subr.bf16.mxu0 0
        %871 = vmatpush1.bf16.msra.mxu0 0
        %872 = vmatprep.subr.bf16.mxu0 0
        %873 = vmatpush1.bf16.msra.mxu0 0
        %874 = vmatprep.subr.bf16.mxu0 0
        %875 = vmatpush1.bf16.msra.mxu0 0
        %876 = vmatprep.subr.bf16.mxu0 0
        %877 = vmatpush1.bf16.msra.mxu0 0
        %878 = vmatprep.subr.bf16.mxu0 0
        %879 = vmatpush1.bf16.msra.mxu0 0
        %880 = vmatprep.subr.bf16.mxu0 0
        %881 = vmatpush1.bf16.msra.mxu0 0
        %882 = vmatprep.subr.bf16.mxu0 0
        %883 = vmatpush1.bf16.msra.mxu0 0
        %884 = vmatprep.subr.bf16.mxu0 0
        %885 = vmatpush1.bf16.msra.mxu0 0
        %886 = vmatprep.mubr.bf16.mxu0 0
        %887 = vmatmul.mubr.bf16.gmra.mrb[0].mxu0 %v770
        %v888 = vpop.f32.mrb[0].mxu0
        %v889 = vadd.f32 %v816, %v888
        %v890 = vpop.f32.mrb[0].mxu0
        %v891 = vadd.f32 %v818, %v890
        %v892 = vpop.f32.mrb[0].mxu0
        %v893 = vadd.f32 %v820, %v892
        %v894 = vpop.f32.mrb[0].mxu0
        %v895 = vadd.f32 %v822, %v894
        %896 = vmatprep.mubr.bf16.mxu0 0
        %897 = vmatmul.mubr.bf16.gmra.mrb[0].mxu0 %v773
        %v898 = vpop.f32.mrb[0].mxu0
        %v899 = vadd.f32 %v826, %v898
        %v900 = vpop.f32.mrb[0].mxu0
        %v901 = vadd.f32 %v828, %v900
        %v902 = vpop.f32.mrb[0].mxu0
        %v903 = vadd.f32 %v830, %v902
        %v904 = vpop.f32.mrb[0].mxu0
        %v905 = vadd.f32 %v832, %v904
        %906 = vmatprep.mubr.bf16.mxu0 0
        %907 = vmatmul.mubr.bf16.gmra.mrb[0].mxu0 %v776
        %v908 = vpop.f32.mrb[0].mxu0
        %v909 = vadd.f32 %v836, %v908
        %v910 = vpop.f32.mrb[0].mxu0
        %v911 = vadd.f32 %v838, %v910
        %v912 = vpop.f32.mrb[0].mxu0
        %v913 = vadd.f32 %v840, %v912
        %v914 = vpop.f32.mrb[0].mxu0
        %v915 = vadd.f32 %v842, %v914
        %916 = vmatprep.mubr.bf16.mxu0 0
        %917 = vmatmul.mubr.bf16.gmra.mrb[0].mxu0 %v779
        %v918 = vpop.f32.mrb[0].mxu0
        %v919 = vadd.f32 %v846, %v918
        %v920 = vpop.f32.mrb[0].mxu0
        %v921 = vadd.f32 %v848, %v920
        %v922 = vpop.f32.mrb[0].mxu0
        %v923 = vadd.f32 %v850, %v922
        %v924 = vpop.f32.mrb[0].mxu0
        %v925 = vadd.f32 %v852, %v924
        %926 = vdwg.mxu0
        %927 = vmatprep.subr.bf16.mxu0 %v325
        %928 = vmatpush1.bf16.msra.mxu0 %v324
        %929 = vmatprep.subr.bf16.mxu0 %v329
        %930 = vmatpush1.bf16.msra.mxu0 %v328
        %931 = vmatprep.subr.bf16.mxu0 %v372
        %932 = vmatpush1.bf16.msra.mxu0 %v371
        %933 = vmatprep.subr.bf16.mxu0 %v376
        %934 = vmatpush1.bf16.msra.mxu0 %v375
        %935 = vmatprep.subr.bf16.mxu0 %v409
        %936 = vmatpush1.bf16.msra.mxu0 %v408
        %937 = vmatprep.subr.bf16.mxu0 %v413
        %938 = vmatpush1.bf16.msra.mxu0 %v412
        %939 = vmatprep.subr.bf16.mxu0 %v446
        %940 = vmatpush1.bf16.msra.mxu0 %v445
        %941 = vmatprep.subr.bf16.mxu0 %v450
        %942 = vmatpush1.bf16.msra.mxu0 %v449
        %943 = vmatprep.subr.bf16.mxu0 %v483
        %944 = vmatpush1.bf16.msra.mxu0 %v482
        %945 = vmatprep.subr.bf16.mxu0 %v487
        %946 = vmatpush1.bf16.msra.mxu0 %v486
        %947 = vmatprep.subr.bf16.mxu0 %v520
        %948 = vmatpush1.bf16.msra.mxu0 %v519
        %949 = vmatprep.subr.bf16.mxu0 %v524
        %950 = vmatpush1.bf16.msra.mxu0 %v523
        %951 = vmatprep.subr.bf16.mxu0 %v557
        %952 = vmatpush1.bf16.msra.mxu0 %v556
        %953 = vmatprep.subr.bf16.mxu0 %v561
        %954 = vmatpush1.bf16.msra.mxu0 %v560
        %955 = vmatprep.subr.bf16.mxu0 %v594
        %956 = vmatpush1.bf16.msra.mxu0 %v593
        %957 = vmatprep.subr.bf16.mxu0 %v598
        %958 = vmatpush1.bf16.msra.mxu0 %v597
        %959 = vmatprep.mubr.bf16.mxu0 %v749
        %960 = vmatmul.mubr.bf16.gmra.mrb[0].mxu0 %v748
        %v961 = vpop.f32.mrb[0].mxu0
        %v962 = vadd.f32 %v671, %v961
        %v963 = vpop.f32.mrb[0].mxu0
        %v964 = vadd.f32 %v671, %v963
        %v965 = vpop.f32.mrb[0].mxu0
        %v966 = vadd.f32 %v676, %v965
        %v967 = vpop.f32.mrb[0].mxu0
        %v968 = vadd.f32 %v676, %v967
        %969 = vmatprep.mubr.bf16.mxu0 %v752
        %970 = vmatmul.mubr.bf16.gmra.mrb[0].mxu0 %v751
        %v971 = vpop.f32.mrb[0].mxu0
        %v972 = vadd.f32 %v681, %v971
        %v973 = vpop.f32.mrb[0].mxu0
        %v974 = vadd.f32 %v681, %v973
        %v975 = vpop.f32.mrb[0].mxu0
        %v976 = vadd.f32 %v686, %v975
        %v977 = vpop.f32.mrb[0].mxu0
        %v978 = vadd.f32 %v686, %v977
        %979 = vmatprep.mubr.bf16.mxu0 %v755
        %980 = vmatmul.mubr.bf16.gmra.mrb[0].mxu0 %v754
        %v981 = vpop.f32.mrb[0].mxu0
        %v982 = vadd.f32 %v691, %v981
        %v983 = vpop.f32.mrb[0].mxu0
        %v984 = vadd.f32 %v691, %v983
        %v985 = vpop.f32.mrb[0].mxu0
        %v986 = vadd.f32 %v696, %v985
        %v987 = vpop.f32.mrb[0].mxu0
        %v988 = vadd.f32 %v696, %v987
        %989 = vmatprep.mubr.bf16.mxu0 %v758
        %990 = vmatmul.mubr.bf16.gmra.mrb[0].mxu0 %v757
        %v991 = vpop.f32.mrb[0].mxu0
        %v992 = vadd.f32 %v701, %v991
        %v993 = vpop.f32.mrb[0].mxu0
        %v994 = vadd.f32 %v701, %v993
        %v995 = vpop.f32.mrb[0].mxu0
        %v996 = vadd.f32 %v706, %v995
        %v997 = vpop.f32.mrb[0].mxu0
        %v998 = vadd.f32 %v706, %v997
        %999 = vdwg.mxu0
        %1000 = vmatprep.subr.bf16.mxu0 %v631
        %1001 = vmatpush1.bf16.msra.mxu0 %v630
        %1002 = vmatprep.subr.bf16.mxu0 %v635
        %1003 = vmatpush1.bf16.msra.mxu0 %v634
        %1004 = vmatprep.subr.bf16.mxu0 0
        %1005 = vmatpush1.bf16.msra.mxu0 0
        %1006 = vmatprep.subr.bf16.mxu0 0
        %1007 = vmatpush1.bf16.msra.mxu0 0
        %1008 = vmatprep.subr.bf16.mxu0 0
        %1009 = vmatpush1.bf16.msra.mxu0 0
        %1010 = vmatprep.subr.bf16.mxu0 0
        %1011 = vmatpush1.bf16.msra.mxu0 0
        %1012 = vmatprep.subr.bf16.mxu0 0
        %1013 = vmatpush1.bf16.msra.mxu0 0
        %1014 = vmatprep.subr.bf16.mxu0 0
        %1015 = vmatpush1.bf16.msra.mxu0 0
        %1016 = vmatprep.subr.bf16.mxu0 0
        %1017 = vmatpush1.bf16.msra.mxu0 0
        %1018 = vmatprep.subr.bf16.mxu0 0
        %1019 = vmatpush1.bf16.msra.mxu0 0
        %1020 = vmatprep.subr.bf16.mxu0 0
        %1021 = vmatpush1.bf16.msra.mxu0 0
        %1022 = vmatprep.subr.bf16.mxu0 0
        %1023 = vmatpush1.bf16.msra.mxu0 0
        %1024 = vmatprep.subr.bf16.mxu0 0
        %1025 = vmatpush1.bf16.msra.mxu0 0
        %1026 = vmatprep.subr.bf16.mxu0 0
        %1027 = vmatpush1.bf16.msra.mxu0 0
        %1028 = vmatprep.subr.bf16.mxu0 0
        %1029 = vmatpush1.bf16.msra.mxu0 0
        %1030 = vmatprep.subr.bf16.mxu0 0
        %1031 = vmatpush1.bf16.msra.mxu0 0
        %1032 = vmatprep.mubr.bf16.mxu0 0
        %1033 = vmatmul.mubr.bf16.gmra.mrb[0].mxu0 %v770
        %v1034 = vpop.f32.mrb[0].mxu0
        %v1035 = vadd.f32 %v962, %v1034
        %v1036 = vpop.f32.mrb[0].mxu0
        %v1037 = vadd.f32 %v964, %v1036
        %v1038 = vpop.f32.mrb[0].mxu0
        %v1039 = vadd.f32 %v966, %v1038
        %v1040 = vpop.f32.mrb[0].mxu0
        %v1041 = vadd.f32 %v968, %v1040
        %1042 = vmatprep.mubr.bf16.mxu0 0
        %1043 = vmatmul.mubr.bf16.gmra.mrb[0].mxu0 %v773
        %v1044 = vpop.f32.mrb[0].mxu0
        %v1045 = vadd.f32 %v972, %v1044
        %v1046 = vpop.f32.mrb[0].mxu0
        %v1047 = vadd.f32 %v974, %v1046
        %v1048 = vpop.f32.mrb[0].mxu0
        %v1049 = vadd.f32 %v976, %v1048
        %v1050 = vpop.f32.mrb[0].mxu0
        %v1051 = vadd.f32 %v978, %v1050
        %1052 = vmatprep.mubr.bf16.mxu0 0
        %1053 = vmatmul.mubr.bf16.gmra.mrb[0].mxu0 %v776
        %v1054 = vpop.f32.mrb[0].mxu0
        %v1055 = vadd.f32 %v982, %v1054
        %v1056 = vpop.f32.mrb[0].mxu0
        %v1057 = vadd.f32 %v984, %v1056
        %v1058 = vpop.f32.mrb[0].mxu0
        %v1059 = vadd.f32 %v986, %v1058
        %v1060 = vpop.f32.mrb[0].mxu0
        %v1061 = vadd.f32 %v988, %v1060
        %1062 = vmatprep.mubr.bf16.mxu0 0
        %1063 = vmatmul.mubr.bf16.gmra.mrb[0].mxu0 %v779
        %v1064 = vpop.f32.mrb[0].mxu0
        %v1065 = vadd.f32 %v992, %v1064
        %v1066 = vpop.f32.mrb[0].mxu0
        %v1067 = vadd.f32 %v994, %v1066
        %v1068 = vpop.f32.mrb[0].mxu0
        %v1069 = vadd.f32 %v996, %v1068
        %v1070 = vpop.f32.mrb[0].mxu0
        %v1071 = vadd.f32 %v998, %v1070
        %1072 = vdwg.mxu0
        %v1073 = vmax.f32 %v889, 0.0
        %v1074 = vmax.f32 %v891, 0.0
        %v1075 = vmax.f32 %v1035, 0.0
        %v1076 = vmax.f32 %v1037, 0.0
        %v1077 = vmax.f32 %v893, 0.0
        %v1078 = vmax.f32 %v895, 0.0
        %v1079 = vmax.f32 %v1039, 0.0
        %v1080 = vmax.f32 %v1041, 0.0
        %v1081 = vmax.f32 %v899, 0.0
        %v1082 = vmax.f32 %v901, 0.0
        %v1083 = vmax.f32 %v1045, 0.0
        %v1084 = vmax.f32 %v1047, 0.0
        %v1085 = vmax.f32 %v903, 0.0
        %v1086 = vmax.f32 %v905, 0.0
        %v1087 = vmax.f32 %v1049, 0.0
        %v1088 = vmax.f32 %v1051, 0.0
        %v1089 = vmax.f32 %v909, 0.0
        %v1090 = vmax.f32 %v911, 0.0
        %v1091 = vmax.f32 %v1055, 0.0
        %v1092 = vmax.f32 %v1057, 0.0
        %v1093 = vmax.f32 %v913, 0.0
        %v1094 = vmax.f32 %v915, 0.0
        %v1095 = vmax.f32 %v1059, 0.0
        %v1096 = vmax.f32 %v1061, 0.0
        %v1097 = vmax.f32 %v919, 0.0
        %v1098 = vmax.f32 %v921, 0.0
        %v1099 = vmax.f32 %v1065, 0.0
        %v1100 = vmax.f32 %v1067, 0.0
        %v1101 = vmax.f32 %v923, 0.0
        %v1102 = vmax.f32 %v925, 0.0
        %v1103 = vmax.f32 %v1069, 0.0
        %v1104 = vmax.f32 %v1071, 0.0
        %v1105 = vld [vmem:[%s1] sm:$0xf]
        %v1107 = vlaneseq
        %v1108 = vshrl.u32 %v1107, 7
        %v1109 = vsub.s32 0, %v1108
        %v1110 = vrot.slane %v1105, %v1109
        %v1111 = vlaneseq
        %v1112 = vshrl.u32 %v1111, 7
        %v1113 = vsub.s32 1, %v1112
        %v1114 = vrot.slane %v1105, %v1113
        %v1115 = vlaneseq
        %v1116 = vshrl.u32 %v1115, 7
        %v1117 = vsub.s32 2, %v1116
        %v1118 = vrot.slane %v1105, %v1117
        %v1119 = vlaneseq
        %v1120 = vshrl.u32 %v1119, 7
        %v1121 = vsub.s32 3, %v1120
        %v1122 = vrot.slane %v1105, %v1121
        %v1127 = vmul.f32 %v1073, %v1110
        %v1128 = vmul.f32 %v1074, %v1114
        %v1129 = vmul.f32 %v1075, %v1118
        %v1130 = vmul.f32 %v1076, %v1122
        %v1131 = vmul.f32 %v1077, %v1110
        %v1132 = vmul.f32 %v1078, %v1114
        %v1133 = vmul.f32 %v1079, %v1118
        %v1134 = vmul.f32 %v1080, %v1122
        %v1135 = vmul.f32 %v1081, %v1110
        %v1136 = vmul.f32 %v1082, %v1114
        %v1137 = vmul.f32 %v1083, %v1118
        %v1138 = vmul.f32 %v1084, %v1122
        %v1139 = vmul.f32 %v1085, %v1110
        %v1140 = vmul.f32 %v1086, %v1114
        %v1141 = vmul.f32 %v1087, %v1118
        %v1142 = vmul.f32 %v1088, %v1122
        %v1143 = vmul.f32 %v1089, %v1110
        %v1144 = vmul.f32 %v1090, %v1114
        %v1145 = vmul.f32 %v1091, %v1118
        %v1146 = vmul.f32 %v1092, %v1122
        %v1147 = vmul.f32 %v1093, %v1110
        %v1148 = vmul.f32 %v1094, %v1114
        %v1149 = vmul.f32 %v1095, %v1118
        %v1150 = vmul.f32 %v1096, %v1122
        %v1151 = vmul.f32 %v1097, %v1110
        %v1152 = vmul.f32 %v1098, %v1114
        %v1153 = vmul.f32 %v1099, %v1118
        %v1154 = vmul.f32 %v1100, %v1122
        %v1155 = vmul.f32 %v1101, %v1110
        %v1156 = vmul.f32 %v1102, %v1114
        %v1157 = vmul.f32 %v1103, %v1118
        %v1158 = vmul.f32 %v1104, %v1122
        %v1159 = vpack.c.bf16 %v1131, %v1127
        %v1160 = vpack.c.bf16 %v1132, %v1128
        %v1161 = vpack.c.bf16 %v1133, %v1129
        %v1162 = vpack.c.bf16 %v1134, %v1130
        %v1163 = vpack.c.bf16 %v1139, %v1135
        %v1164 = vpack.c.bf16 %v1140, %v1136
        %v1165 = vpack.c.bf16 %v1141, %v1137
        %v1166 = vpack.c.bf16 %v1142, %v1138
        %v1167 = vpack.c.bf16 %v1147, %v1143
        %v1168 = vpack.c.bf16 %v1148, %v1144
        %v1169 = vpack.c.bf16 %v1149, %v1145
        %v1170 = vpack.c.bf16 %v1150, %v1146
        %v1171 = vpack.c.bf16 %v1155, %v1151
        %v1172 = vpack.c.bf16 %v1156, %v1152
        %v1173 = vpack.c.bf16 %v1157, %v1153
        %v1174 = vpack.c.bf16 %v1158, %v1154
        %1191 = vrot.lane.b32.xlu0 %v1159, 127
        %v1192 = vpop.permute.xlu0 %1191
        %1193 = vrot.lane.b32.xlu0 %v1160, 127
        %v1194 = vpop.permute.xlu0 %1193
        %1195 = vrot.lane.b32.xlu0 %v1161, 127
        %v1196 = vpop.permute.xlu0 %1195
        %1197 = vrot.lane.b32.xlu0 %v1162, 127
        %v1198 = vpop.permute.xlu0 %1197
        %1199 = vrot.lane.b32.xlu0 %v1163, 127
        %v1200 = vpop.permute.xlu0 %1199
        %1201 = vrot.lane.b32.xlu0 %v1164, 127
        %v1202 = vpop.permute.xlu0 %1201
        %1203 = vrot.lane.b32.xlu0 %v1165, 127
        %v1204 = vpop.permute.xlu0 %1203
        %1205 = vrot.lane.b32.xlu0 %v1166, 127
        %v1206 = vpop.permute.xlu0 %1205
        %1207 = vrot.lane.b32.xlu0 %v1167, 127
        %v1208 = vpop.permute.xlu0 %1207
        %1209 = vrot.lane.b32.xlu0 %v1168, 127
        %v1210 = vpop.permute.xlu0 %1209
        %1211 = vrot.lane.b32.xlu0 %v1169, 127
        %v1212 = vpop.permute.xlu0 %1211
        %1213 = vrot.lane.b32.xlu0 %v1170, 127
        %v1214 = vpop.permute.xlu0 %1213
        %1215 = vrot.lane.b32.xlu0 %v1171, 127
        %v1216 = vpop.permute.xlu0 %1215
        %1217 = vrot.lane.b32.xlu0 %v1172, 127
        %v1218 = vpop.permute.xlu0 %1217
        %1219 = vrot.lane.b32.xlu0 %v1173, 127
        %v1220 = vpop.permute.xlu0 %1219
        %1221 = vrot.lane.b32.xlu0 %v1174, 127
        %v1222 = vpop.permute.xlu0 %1221
        %v1223 = vsel %vm368, %v1192, %v1194
        %v1224 = vsel %vm368, %v1194, %v1196
        %v1225 = vsel %vm368, %v1196, %v1198
        %v1226 = vsel %vm368, %v1200, %v1202
        %v1227 = vsel %vm368, %v1202, %v1204
        %v1228 = vsel %vm368, %v1204, %v1206
        %v1229 = vsel %vm368, %v1208, %v1210
        %v1230 = vsel %vm368, %v1210, %v1212
        %v1231 = vsel %vm368, %v1212, %v1214
        %v1232 = vsel %vm368, %v1216, %v1218
        %v1233 = vsel %vm368, %v1218, %v1220
        %v1234 = vsel %vm368, %v1220, %v1222
        %1247 = vrot.lane.b32.xlu0 %v1159, 126
        %v1248 = vpop.permute.xlu0 %1247
        %1249 = vrot.lane.b32.xlu0 %v1160, 126
        %v1250 = vpop.permute.xlu0 %1249
        %1251 = vrot.lane.b32.xlu0 %v1161, 126
        %v1252 = vpop.permute.xlu0 %1251
        %1253 = vrot.lane.b32.xlu0 %v1162, 126
        %v1254 = vpop.permute.xlu0 %1253
        %1255 = vrot.lane.b32.xlu0 %v1163, 126
        %v1256 = vpop.permute.xlu0 %1255
        %1257 = vrot.lane.b32.xlu0 %v1164, 126
        %v1258 = vpop.permute.xlu0 %1257
        %1259 = vrot.lane.b32.xlu0 %v1165, 126
        %v1260 = vpop.permute.xlu0 %1259
        %1261 = vrot.lane.b32.xlu0 %v1166, 126
        %v1262 = vpop.permute.xlu0 %1261
        %1263 = vrot.lane.b32.xlu0 %v1167, 126
        %v1264 = vpop.permute.xlu0 %1263
        %1265 = vrot.lane.b32.xlu0 %v1168, 126
        %v1266 = vpop.permute.xlu0 %1265
        %1267 = vrot.lane.b32.xlu0 %v1169, 126
        %v1268 = vpop.permute.xlu0 %1267
        %1269 = vrot.lane.b32.xlu0 %v1170, 126
        %v1270 = vpop.permute.xlu0 %1269
        %1271 = vrot.lane.b32.xlu0 %v1171, 126
        %v1272 = vpop.permute.xlu0 %1271
        %1273 = vrot.lane.b32.xlu0 %v1172, 126
        %v1274 = vpop.permute.xlu0 %1273
        %1275 = vrot.lane.b32.xlu0 %v1173, 126
        %v1276 = vpop.permute.xlu0 %1275
        %1277 = vrot.lane.b32.xlu0 %v1174, 126
        %v1278 = vpop.permute.xlu0 %1277
        %v1279 = vsel %vm405, %v1248, %v1250
        %v1280 = vsel %vm405, %v1250, %v1252
        %v1281 = vsel %vm405, %v1252, %v1254
        %v1282 = vsel %vm405, %v1256, %v1258
        %v1283 = vsel %vm405, %v1258, %v1260
        %v1284 = vsel %vm405, %v1260, %v1262
        %v1285 = vsel %vm405, %v1264, %v1266
        %v1286 = vsel %vm405, %v1266, %v1268
        %v1287 = vsel %vm405, %v1268, %v1270
        %v1288 = vsel %vm405, %v1272, %v1274
        %v1289 = vsel %vm405, %v1274, %v1276
        %v1290 = vsel %vm405, %v1276, %v1278
        %1303 = vrot.lane.b32.xlu0 %v1159, 110
        %v1304 = vpop.permute.xlu0 %1303
        %1305 = vrot.lane.b32.xlu0 %v1160, 110
        %v1306 = vpop.permute.xlu0 %1305
        %1307 = vrot.lane.b32.xlu0 %v1161, 110
        %v1308 = vpop.permute.xlu0 %1307
        %1309 = vrot.lane.b32.xlu0 %v1162, 110
        %v1310 = vpop.permute.xlu0 %1309
        %1311 = vrot.lane.b32.xlu0 %v1163, 110
        %v1312 = vpop.permute.xlu0 %1311
        %1313 = vrot.lane.b32.xlu0 %v1164, 110
        %v1314 = vpop.permute.xlu0 %1313
        %1315 = vrot.lane.b32.xlu0 %v1165, 110
        %v1316 = vpop.permute.xlu0 %1315
        %1317 = vrot.lane.b32.xlu0 %v1166, 110
        %v1318 = vpop.permute.xlu0 %1317
        %1319 = vrot.lane.b32.xlu0 %v1167, 110
        %v1320 = vpop.permute.xlu0 %1319
        %1321 = vrot.lane.b32.xlu0 %v1168, 110
        %v1322 = vpop.permute.xlu0 %1321
        %1323 = vrot.lane.b32.xlu0 %v1169, 110
        %v1324 = vpop.permute.xlu0 %1323
        %1325 = vrot.lane.b32.xlu0 %v1170, 110
        %v1326 = vpop.permute.xlu0 %1325
        %1327 = vrot.lane.b32.xlu0 %v1171, 110
        %v1328 = vpop.permute.xlu0 %1327
        %1329 = vrot.lane.b32.xlu0 %v1172, 110
        %v1330 = vpop.permute.xlu0 %1329
        %1331 = vrot.lane.b32.xlu0 %v1173, 110
        %v1332 = vpop.permute.xlu0 %1331
        %1333 = vrot.lane.b32.xlu0 %v1174, 110
        %v1334 = vpop.permute.xlu0 %1333
        %v1335 = vsel %vm442, %v1304, %v1306
        %v1336 = vsel %vm442, %v1306, %v1308
        %v1337 = vsel %vm442, %v1308, %v1310
        %v1338 = vsel %vm442, %v1312, %v1314
        %v1339 = vsel %vm442, %v1314, %v1316
        %v1340 = vsel %vm442, %v1316, %v1318
        %v1341 = vsel %vm442, %v1320, %v1322
        %v1342 = vsel %vm442, %v1322, %v1324
        %v1343 = vsel %vm442, %v1324, %v1326
        %v1344 = vsel %vm442, %v1328, %v1330
        %v1345 = vsel %vm442, %v1330, %v1332
        %v1346 = vsel %vm442, %v1332, %v1334
        %1359 = vrot.lane.b32.xlu0 %v1159, 109
        %v1360 = vpop.permute.xlu0 %1359
        %1361 = vrot.lane.b32.xlu0 %v1160, 109
        %v1362 = vpop.permute.xlu0 %1361
        %1363 = vrot.lane.b32.xlu0 %v1161, 109
        %v1364 = vpop.permute.xlu0 %1363
        %1365 = vrot.lane.b32.xlu0 %v1162, 109
        %v1366 = vpop.permute.xlu0 %1365
        %1367 = vrot.lane.b32.xlu0 %v1163, 109
        %v1368 = vpop.permute.xlu0 %1367
        %1369 = vrot.lane.b32.xlu0 %v1164, 109
        %v1370 = vpop.permute.xlu0 %1369
        %1371 = vrot.lane.b32.xlu0 %v1165, 109
        %v1372 = vpop.permute.xlu0 %1371
        %1373 = vrot.lane.b32.xlu0 %v1166, 109
        %v1374 = vpop.permute.xlu0 %1373
        %1375 = vrot.lane.b32.xlu0 %v1167, 109
        %v1376 = vpop.permute.xlu0 %1375
        %1377 = vrot.lane.b32.xlu0 %v1168, 109
        %v1378 = vpop.permute.xlu0 %1377
        %1379 = vrot.lane.b32.xlu0 %v1169, 109
        %v1380 = vpop.permute.xlu0 %1379
        %1381 = vrot.lane.b32.xlu0 %v1170, 109
        %v1382 = vpop.permute.xlu0 %1381
        %1383 = vrot.lane.b32.xlu0 %v1171, 109
        %v1384 = vpop.permute.xlu0 %1383
        %1385 = vrot.lane.b32.xlu0 %v1172, 109
        %v1386 = vpop.permute.xlu0 %1385
        %1387 = vrot.lane.b32.xlu0 %v1173, 109
        %v1388 = vpop.permute.xlu0 %1387
        %1389 = vrot.lane.b32.xlu0 %v1174, 109
        %v1390 = vpop.permute.xlu0 %1389
        %v1391 = vsel %vm479, %v1360, %v1362
        %v1392 = vsel %vm479, %v1362, %v1364
        %v1393 = vsel %vm479, %v1364, %v1366
        %v1394 = vsel %vm479, %v1368, %v1370
        %v1395 = vsel %vm479, %v1370, %v1372
        %v1396 = vsel %vm479, %v1372, %v1374
        %v1397 = vsel %vm479, %v1376, %v1378
        %v1398 = vsel %vm479, %v1378, %v1380
        %v1399 = vsel %vm479, %v1380, %v1382
        %v1400 = vsel %vm479, %v1384, %v1386
        %v1401 = vsel %vm479, %v1386, %v1388
        %v1402 = vsel %vm479, %v1388, %v1390
        %1415 = vrot.lane.b32.xlu0 %v1159, 108
        %v1416 = vpop.permute.xlu0 %1415
        %1417 = vrot.lane.b32.xlu0 %v1160, 108
        %v1418 = vpop.permute.xlu0 %1417
        %1419 = vrot.lane.b32.xlu0 %v1161, 108
        %v1420 = vpop.permute.xlu0 %1419
        %1421 = vrot.lane.b32.xlu0 %v1162, 108
        %v1422 = vpop.permute.xlu0 %1421
        %1423 = vrot.lane.b32.xlu0 %v1163, 108
        %v1424 = vpop.permute.xlu0 %1423
        %1425 = vrot.lane.b32.xlu0 %v1164, 108
        %v1426 = vpop.permute.xlu0 %1425
        %1427 = vrot.lane.b32.xlu0 %v1165, 108
        %v1428 = vpop.permute.xlu0 %1427
        %1429 = vrot.lane.b32.xlu0 %v1166, 108
        %v1430 = vpop.permute.xlu0 %1429
        %1431 = vrot.lane.b32.xlu0 %v1167, 108
        %v1432 = vpop.permute.xlu0 %1431
        %1433 = vrot.lane.b32.xlu0 %v1168, 108
        %v1434 = vpop.permute.xlu0 %1433
        %1435 = vrot.lane.b32.xlu0 %v1169, 108
        %v1436 = vpop.permute.xlu0 %1435
        %1437 = vrot.lane.b32.xlu0 %v1170, 108
        %v1438 = vpop.permute.xlu0 %1437
        %1439 = vrot.lane.b32.xlu0 %v1171, 108
        %v1440 = vpop.permute.xlu0 %1439
        %1441 = vrot.lane.b32.xlu0 %v1172, 108
        %v1442 = vpop.permute.xlu0 %1441
        %1443 = vrot.lane.b32.xlu0 %v1173, 108
        %v1444 = vpop.permute.xlu0 %1443
        %1445 = vrot.lane.b32.xlu0 %v1174, 108
        %v1446 = vpop.permute.xlu0 %1445
        %v1447 = vsel %vm516, %v1416, %v1418
        %v1448 = vsel %vm516, %v1418, %v1420
        %v1449 = vsel %vm516, %v1420, %v1422
        %v1450 = vsel %vm516, %v1424, %v1426
        %v1451 = vsel %vm516, %v1426, %v1428
        %v1452 = vsel %vm516, %v1428, %v1430
        %v1453 = vsel %vm516, %v1432, %v1434
        %v1454 = vsel %vm516, %v1434, %v1436
        %v1455 = vsel %vm516, %v1436, %v1438
        %v1456 = vsel %vm516, %v1440, %v1442
        %v1457 = vsel %vm516, %v1442, %v1444
        %v1458 = vsel %vm516, %v1444, %v1446
        %1471 = vrot.lane.b32.xlu0 %v1159, 92
        %v1472 = vpop.permute.xlu0 %1471
        %1473 = vrot.lane.b32.xlu0 %v1160, 92
        %v1474 = vpop.permute.xlu0 %1473
        %1475 = vrot.lane.b32.xlu0 %v1161, 92
        %v1476 = vpop.permute.xlu0 %1475
        %1477 = vrot.lane.b32.xlu0 %v1162, 92
        %v1478 = vpop.permute.xlu0 %1477
        %1479 = vrot.lane.b32.xlu0 %v1163, 92
        %v1480 = vpop.permute.xlu0 %1479
        %1481 = vrot.lane.b32.xlu0 %v1164, 92
        %v1482 = vpop.permute.xlu0 %1481
        %1483 = vrot.lane.b32.xlu0 %v1165, 92
        %v1484 = vpop.permute.xlu0 %1483
        %1485 = vrot.lane.b32.xlu0 %v1166, 92
        %v1486 = vpop.permute.xlu0 %1485
        %1487 = vrot.lane.b32.xlu0 %v1167, 92
        %v1488 = vpop.permute.xlu0 %1487
        %1489 = vrot.lane.b32.xlu0 %v1168, 92
        %v1490 = vpop.permute.xlu0 %1489
        %1491 = vrot.lane.b32.xlu0 %v1169, 92
        %v1492 = vpop.permute.xlu0 %1491
        %1493 = vrot.lane.b32.xlu0 %v1170, 92
        %v1494 = vpop.permute.xlu0 %1493
        %1495 = vrot.lane.b32.xlu0 %v1171, 92
        %v1496 = vpop.permute.xlu0 %1495
        %1497 = vrot.lane.b32.xlu0 %v1172, 92
        %v1498 = vpop.permute.xlu0 %1497
        %1499 = vrot.lane.b32.xlu0 %v1173, 92
        %v1500 = vpop.permute.xlu0 %1499
        %1501 = vrot.lane.b32.xlu0 %v1174, 92
        %v1502 = vpop.permute.xlu0 %1501
        %v1503 = vsel %vm553, %v1472, %v1474
        %v1504 = vsel %vm553, %v1474, %v1476
        %v1505 = vsel %vm553, %v1476, %v1478
        %v1506 = vsel %vm553, %v1480, %v1482
        %v1507 = vsel %vm553, %v1482, %v1484
        %v1508 = vsel %vm553, %v1484, %v1486
        %v1509 = vsel %vm553, %v1488, %v1490
        %v1510 = vsel %vm553, %v1490, %v1492
        %v1511 = vsel %vm553, %v1492, %v1494
        %v1512 = vsel %vm553, %v1496, %v1498
        %v1513 = vsel %vm553, %v1498, %v1500
        %v1514 = vsel %vm553, %v1500, %v1502
        %1527 = vrot.lane.b32.xlu0 %v1159, 91
        %v1528 = vpop.permute.xlu0 %1527
        %1529 = vrot.lane.b32.xlu0 %v1160, 91
        %v1530 = vpop.permute.xlu0 %1529
        %1531 = vrot.lane.b32.xlu0 %v1161, 91
        %v1532 = vpop.permute.xlu0 %1531
        %1533 = vrot.lane.b32.xlu0 %v1162, 91
        %v1534 = vpop.permute.xlu0 %1533
        %1535 = vrot.lane.b32.xlu0 %v1163, 91
        %v1536 = vpop.permute.xlu0 %1535
        %1537 = vrot.lane.b32.xlu0 %v1164, 91
        %v1538 = vpop.permute.xlu0 %1537
        %1539 = vrot.lane.b32.xlu0 %v1165, 91
        %v1540 = vpop.permute.xlu0 %1539
        %1541 = vrot.lane.b32.xlu0 %v1166, 91
        %v1542 = vpop.permute.xlu0 %1541
        %1543 = vrot.lane.b32.xlu0 %v1167, 91
        %v1544 = vpop.permute.xlu0 %1543
        %1545 = vrot.lane.b32.xlu0 %v1168, 91
        %v1546 = vpop.permute.xlu0 %1545
        %1547 = vrot.lane.b32.xlu0 %v1169, 91
        %v1548 = vpop.permute.xlu0 %1547
        %1549 = vrot.lane.b32.xlu0 %v1170, 91
        %v1550 = vpop.permute.xlu0 %1549
        %1551 = vrot.lane.b32.xlu0 %v1171, 91
        %v1552 = vpop.permute.xlu0 %1551
        %1553 = vrot.lane.b32.xlu0 %v1172, 91
        %v1554 = vpop.permute.xlu0 %1553
        %1555 = vrot.lane.b32.xlu0 %v1173, 91
        %v1556 = vpop.permute.xlu0 %1555
        %1557 = vrot.lane.b32.xlu0 %v1174, 91
        %v1558 = vpop.permute.xlu0 %1557
        %v1559 = vsel %vm590, %v1528, %v1530
        %v1560 = vsel %vm590, %v1530, %v1532
        %v1561 = vsel %vm590, %v1532, %v1534
        %v1562 = vsel %vm590, %v1536, %v1538
        %v1563 = vsel %vm590, %v1538, %v1540
        %v1564 = vsel %vm590, %v1540, %v1542
        %v1565 = vsel %vm590, %v1544, %v1546
        %v1566 = vsel %vm590, %v1546, %v1548
        %v1567 = vsel %vm590, %v1548, %v1550
        %v1568 = vsel %vm590, %v1552, %v1554
        %v1569 = vsel %vm590, %v1554, %v1556
        %v1570 = vsel %vm590, %v1556, %v1558
        %1583 = vrot.lane.b32.xlu0 %v1159, 90
        %v1584 = vpop.permute.xlu0 %1583
        %1585 = vrot.lane.b32.xlu0 %v1160, 90
        %v1586 = vpop.permute.xlu0 %1585
        %1587 = vrot.lane.b32.xlu0 %v1161, 90
        %v1588 = vpop.permute.xlu0 %1587
        %1589 = vrot.lane.b32.xlu0 %v1162, 90
        %v1590 = vpop.permute.xlu0 %1589
        %1591 = vrot.lane.b32.xlu0 %v1163, 90
        %v1592 = vpop.permute.xlu0 %1591
        %1593 = vrot.lane.b32.xlu0 %v1164, 90
        %v1594 = vpop.permute.xlu0 %1593
        %1595 = vrot.lane.b32.xlu0 %v1165, 90
        %v1596 = vpop.permute.xlu0 %1595
        %1597 = vrot.lane.b32.xlu0 %v1166, 90
        %v1598 = vpop.permute.xlu0 %1597
        %1599 = vrot.lane.b32.xlu0 %v1167, 90
        %v1600 = vpop.permute.xlu0 %1599
        %1601 = vrot.lane.b32.xlu0 %v1168, 90
        %v1602 = vpop.permute.xlu0 %1601
        %1603 = vrot.lane.b32.xlu0 %v1169, 90
        %v1604 = vpop.permute.xlu0 %1603
        %1605 = vrot.lane.b32.xlu0 %v1170, 90
        %v1606 = vpop.permute.xlu0 %1605
        %1607 = vrot.lane.b32.xlu0 %v1171, 90
        %v1608 = vpop.permute.xlu0 %1607
        %1609 = vrot.lane.b32.xlu0 %v1172, 90
        %v1610 = vpop.permute.xlu0 %1609
        %1611 = vrot.lane.b32.xlu0 %v1173, 90
        %v1612 = vpop.permute.xlu0 %1611
        %1613 = vrot.lane.b32.xlu0 %v1174, 90
        %v1614 = vpop.permute.xlu0 %1613
        %v1615 = vsel %vm627, %v1584, %v1586
        %v1616 = vsel %vm627, %v1586, %v1588
        %v1617 = vsel %vm627, %v1588, %v1590
        %v1618 = vsel %vm627, %v1592, %v1594
        %v1619 = vsel %vm627, %v1594, %v1596
        %v1620 = vsel %vm627, %v1596, %v1598
        %v1621 = vsel %vm627, %v1600, %v1602
        %v1622 = vsel %vm627, %v1602, %v1604
        %v1623 = vsel %vm627, %v1604, %v1606
        %v1624 = vsel %vm627, %v1608, %v1610
        %v1625 = vsel %vm627, %v1610, %v1612
        %v1626 = vsel %vm627, %v1612, %v1614
        %v1639 = vld [vmem:[%s4] sm:$0xff]
        %v1640 = vld [vmem:[%s4 + $0x8] sm:$0xff]
        %v1641 = vld [vmem:[%s4 + $0x10] sm:$0xf]
        %v1642 = vld [vmem:[%s5] sm:$0xff]
        %1644 = vset.pattern.permute.xlu0 0
        %1645 = vperm.xlu0 %1644, %v1642
        %v1646 = vpop.permute.xlu0 %1645
        %v1651 = vunpack.c.l.b16 %v1639
        %v1652 = vunpack.c.h.b16 %v1639
        %v1653 = vunpack.c.l.b16 %v1640
        %v1654 = vunpack.c.h.b16 %v1640
        %v1655 = vunpack.c.l.b16 %v1641
        %v1656 = vpack.c.b16 %v1651, %v1651
        %v1657 = vpack.c.b16 %v1652, %v1652
        %v1658 = vpack.c.b16 %v1653, %v1653
        %v1659 = vpack.c.b16 %v1654, %v1654
        %v1660 = vpack.c.b16 %v1655, %v1655
        %vm1665 = vcmask 523264
        %v1667 = vsel %vm1665, %v1660, 0
        %1669 = vmatprep.subr.bf16.mxu0 %v1160
        %1670 = vmatpush1.bf16.msra.mxu0 %v1159
        %1671 = vmatprep.subr.bf16.mxu0 %v1164
        %1672 = vmatpush1.bf16.msra.mxu0 %v1163
        %1673 = vmatprep.subr.bf16.mxu0 %v1168
        %1674 = vmatpush1.bf16.msra.mxu0 %v1167
        %1675 = vmatprep.subr.bf16.mxu0 %v1172
        %1676 = vmatpush1.bf16.msra.mxu0 %v1171
        %1677 = vmatprep.subr.bf16.mxu0 %v1224
        %1678 = vmatpush1.bf16.msra.mxu0 %v1223
        %1679 = vmatprep.subr.bf16.mxu0 %v1227
        %1680 = vmatpush1.bf16.msra.mxu0 %v1226
        %1681 = vmatprep.subr.bf16.mxu0 %v1230
        %1682 = vmatpush1.bf16.msra.mxu0 %v1229
        %1683 = vmatprep.subr.bf16.mxu0 %v1233
        %1684 = vmatpush1.bf16.msra.mxu0 %v1232
        %1685 = vmatprep.subr.bf16.mxu0 %v1280
        %1686 = vmatpush1.bf16.msra.mxu0 %v1279
        %1687 = vmatprep.subr.bf16.mxu0 %v1283
        %1688 = vmatpush1.bf16.msra.mxu0 %v1282
        %1689 = vmatprep.subr.bf16.mxu0 %v1286
        %1690 = vmatpush1.bf16.msra.mxu0 %v1285
        %1691 = vmatprep.subr.bf16.mxu0 %v1289
        %1692 = vmatpush1.bf16.msra.mxu0 %v1288
        %1693 = vmatprep.subr.bf16.mxu0 %v1336
        %1694 = vmatpush1.bf16.msra.mxu0 %v1335
        %1695 = vmatprep.subr.bf16.mxu0 %v1339
        %1696 = vmatpush1.bf16.msra.mxu0 %v1338
        %1697 = vmatprep.subr.bf16.mxu0 %v1342
        %1698 = vmatpush1.bf16.msra.mxu0 %v1341
        %1699 = vmatprep.subr.bf16.mxu0 %v1345
        %1700 = vmatpush1.bf16.msra.mxu0 %v1344
        %1701 = vmatprep.mubr.bf16.mxu0 %v1657
        %1702 = vmatmul.mubr.bf16.gmra.mrb[0].mxu0 %v1656
        %v1703 = vpop.f32.mrb[0].mxu0
        %v1704 = vadd.f32 %v1646, %v1703
        %v1705 = vpop.f32.mrb[0].mxu0
        %v1706 = vadd.f32 %v1646, %v1705
        %v1707 = vpop.f32.mrb[0].mxu0
        %v1708 = vpop.f32.mrb[0].mxu0
        %1709 = vdwg.mxu0
        %1710 = vmatprep.subr.bf16.mxu0 %v1392
        %1711 = vmatpush1.bf16.msra.mxu0 %v1391
        %1712 = vmatprep.subr.bf16.mxu0 %v1395
        %1713 = vmatpush1.bf16.msra.mxu0 %v1394
        %1714 = vmatprep.subr.bf16.mxu0 %v1398
        %1715 = vmatpush1.bf16.msra.mxu0 %v1397
        %1716 = vmatprep.subr.bf16.mxu0 %v1401
        %1717 = vmatpush1.bf16.msra.mxu0 %v1400
        %1718 = vmatprep.subr.bf16.mxu0 %v1448
        %1719 = vmatpush1.bf16.msra.mxu0 %v1447
        %1720 = vmatprep.subr.bf16.mxu0 %v1451
        %1721 = vmatpush1.bf16.msra.mxu0 %v1450
        %1722 = vmatprep.subr.bf16.mxu0 %v1454
        %1723 = vmatpush1.bf16.msra.mxu0 %v1453
        %1724 = vmatprep.subr.bf16.mxu0 %v1457
        %1725 = vmatpush1.bf16.msra.mxu0 %v1456
        %1726 = vmatprep.subr.bf16.mxu0 %v1504
        %1727 = vmatpush1.bf16.msra.mxu0 %v1503
        %1728 = vmatprep.subr.bf16.mxu0 %v1507
        %1729 = vmatpush1.bf16.msra.mxu0 %v1506
        %1730 = vmatprep.subr.bf16.mxu0 %v1510
        %1731 = vmatpush1.bf16.msra.mxu0 %v1509
        %1732 = vmatprep.subr.bf16.mxu0 %v1513
        %1733 = vmatpush1.bf16.msra.mxu0 %v1512
        %1734 = vmatprep.subr.bf16.mxu0 %v1560
        %1735 = vmatpush1.bf16.msra.mxu0 %v1559
        %1736 = vmatprep.subr.bf16.mxu0 %v1563
        %1737 = vmatpush1.bf16.msra.mxu0 %v1562
        %1738 = vmatprep.subr.bf16.mxu0 %v1566
        %1739 = vmatpush1.bf16.msra.mxu0 %v1565
        %1740 = vmatprep.subr.bf16.mxu0 %v1569
        %1741 = vmatpush1.bf16.msra.mxu0 %v1568
        %1742 = vmatprep.mubr.bf16.mxu0 %v1659
        %1743 = vmatmul.mubr.bf16.gmra.mrb[0].mxu0 %v1658
        %v1744 = vpop.f32.mrb[0].mxu0
        %v1745 = vadd.f32 %v1704, %v1744
        %v1746 = vpop.f32.mrb[0].mxu0
        %v1747 = vadd.f32 %v1706, %v1746
        %v1748 = vpop.f32.mrb[0].mxu0
        %v1749 = vpop.f32.mrb[0].mxu0
        %1750 = vdwg.mxu0
        %1751 = vmatprep.subr.bf16.mxu0 %v1616
        %1752 = vmatpush1.bf16.msra.mxu0 %v1615
        %1753 = vmatprep.subr.bf16.mxu0 %v1619
        %1754 = vmatpush1.bf16.msra.mxu0 %v1618
        %1755 = vmatprep.subr.bf16.mxu0 %v1622
        %1756 = vmatpush1.bf16.msra.mxu0 %v1621
        %1757 = vmatprep.subr.bf16.mxu0 %v1625
        %1758 = vmatpush1.bf16.msra.mxu0 %v1624
        %1759 = vmatprep.subr.bf16.mxu0 0
        %1760 = vmatpush1.bf16.msra.mxu0 0
        %1761 = vmatprep.subr.bf16.mxu0 0
        %1762 = vmatpush1.bf16.msra.mxu0 0
        %1763 = vmatprep.subr.bf16.mxu0 0
        %1764 = vmatpush1.bf16.msra.mxu0 0
        %1765 = vmatprep.subr.bf16.mxu0 0
        %1766 = vmatpush1.bf16.msra.mxu0 0
        %1767 = vmatprep.subr.bf16.mxu0 0
        %1768 = vmatpush1.bf16.msra.mxu0 0
        %1769 = vmatprep.subr.bf16.mxu0 0
        %1770 = vmatpush1.bf16.msra.mxu0 0
        %1771 = vmatprep.subr.bf16.mxu0 0
        %1772 = vmatpush1.bf16.msra.mxu0 0
        %1773 = vmatprep.subr.bf16.mxu0 0
        %1774 = vmatpush1.bf16.msra.mxu0 0
        %1775 = vmatprep.subr.bf16.mxu0 0
        %1776 = vmatpush1.bf16.msra.mxu0 0
        %1777 = vmatprep.subr.bf16.mxu0 0
        %1778 = vmatpush1.bf16.msra.mxu0 0
        %1779 = vmatprep.subr.bf16.mxu0 0
        %1780 = vmatpush1.bf16.msra.mxu0 0
        %1781 = vmatprep.subr.bf16.mxu0 0
        %1782 = vmatpush1.bf16.msra.mxu0 0
        %1783 = vmatprep.mubr.bf16.mxu0 0
        %1784 = vmatmul.mubr.bf16.gmra.mrb[0].mxu0 %v1667
        %v1785 = vpop.f32.mrb[0].mxu0
        %v1786 = vadd.f32 %v1745, %v1785
        %v1787 = vpop.f32.mrb[0].mxu0
        %v1788 = vadd.f32 %v1747, %v1787
        %v1789 = vpop.f32.mrb[0].mxu0
        %v1790 = vpop.f32.mrb[0].mxu0
        %1791 = vdwg.mxu0
        %1792 = vmatprep.subr.bf16.mxu0 0
        %1793 = vmatpush1.bf16.msra.mxu0 %v1161
        %1794 = vmatprep.subr.bf16.mxu0 0
        %1795 = vmatpush1.bf16.msra.mxu0 %v1165
        %1796 = vmatprep.subr.bf16.mxu0 0
        %1797 = vmatpush1.bf16.msra.mxu0 %v1169
        %1798 = vmatprep.subr.bf16.mxu0 0
        %1799 = vmatpush1.bf16.msra.mxu0 %v1173
        %1800 = vmatprep.subr.bf16.mxu0 0
        %1801 = vmatpush1.bf16.msra.mxu0 %v1225
        %1802 = vmatprep.subr.bf16.mxu0 0
        %1803 = vmatpush1.bf16.msra.mxu0 %v1228
        %1804 = vmatprep.subr.bf16.mxu0 0
        %1805 = vmatpush1.bf16.msra.mxu0 %v1231
        %1806 = vmatprep.subr.bf16.mxu0 0
        %1807 = vmatpush1.bf16.msra.mxu0 %v1234
        %1808 = vmatprep.subr.bf16.mxu0 0
        %1809 = vmatpush1.bf16.msra.mxu0 %v1281
        %1810 = vmatprep.subr.bf16.mxu0 0
        %1811 = vmatpush1.bf16.msra.mxu0 %v1284
        %1812 = vmatprep.subr.bf16.mxu0 0
        %1813 = vmatpush1.bf16.msra.mxu0 %v1287
        %1814 = vmatprep.subr.bf16.mxu0 0
        %1815 = vmatpush1.bf16.msra.mxu0 %v1290
        %1816 = vmatprep.subr.bf16.mxu0 0
        %1817 = vmatpush1.bf16.msra.mxu0 %v1337
        %1818 = vmatprep.subr.bf16.mxu0 0
        %1819 = vmatpush1.bf16.msra.mxu0 %v1340
        %1820 = vmatprep.subr.bf16.mxu0 0
        %1821 = vmatpush1.bf16.msra.mxu0 %v1343
        %1822 = vmatprep.subr.bf16.mxu0 0
        %1823 = vmatpush1.bf16.msra.mxu0 %v1346
        %1824 = vmatprep.mubr.bf16.mxu0 %v1657
        %1825 = vmatmul.mubr.bf16.gmra.mrb[0].mxu0 %v1656
        %v1826 = vpop.f32.mrb[0].mxu0
        %v1827 = vadd.f32 %v1646, %v1826
        %v1828 = vpop.f32.mrb[0].mxu0
        %v1829 = vpop.f32.mrb[0].mxu0
        %v1830 = vpop.f32.mrb[0].mxu0
        %1831 = vdwg.mxu0
        %1832 = vmatprep.subr.bf16.mxu0 0
        %1833 = vmatpush1.bf16.msra.mxu0 %v1393
        %1834 = vmatprep.subr.bf16.mxu0 0
        %1835 = vmatpush1.bf16.msra.mxu0 %v1396
        %1836 = vmatprep.subr.bf16.mxu0 0
        %1837 = vmatpush1.bf16.msra.mxu0 %v1399
        %1838 = vmatprep.subr.bf16.mxu0 0
        %1839 = vmatpush1.bf16.msra.mxu0 %v1402
        %1840 = vmatprep.subr.bf16.mxu0 0
        %1841 = vmatpush1.bf16.msra.mxu0 %v1449
        %1842 = vmatprep.subr.bf16.mxu0 0
        %1843 = vmatpush1.bf16.msra.mxu0 %v1452
        %1844 = vmatprep.subr.bf16.mxu0 0
        %1845 = vmatpush1.bf16.msra.mxu0 %v1455
        %1846 = vmatprep.subr.bf16.mxu0 0
        %1847 = vmatpush1.bf16.msra.mxu0 %v1458
        %1848 = vmatprep.subr.bf16.mxu0 0
        %1849 = vmatpush1.bf16.msra.mxu0 %v1505
        %1850 = vmatprep.subr.bf16.mxu0 0
        %1851 = vmatpush1.bf16.msra.mxu0 %v1508
        %1852 = vmatprep.subr.bf16.mxu0 0
        %1853 = vmatpush1.bf16.msra.mxu0 %v1511
        %1854 = vmatprep.subr.bf16.mxu0 0
        %1855 = vmatpush1.bf16.msra.mxu0 %v1514
        %1856 = vmatprep.subr.bf16.mxu0 0
        %1857 = vmatpush1.bf16.msra.mxu0 %v1561
        %1858 = vmatprep.subr.bf16.mxu0 0
        %1859 = vmatpush1.bf16.msra.mxu0 %v1564
        %1860 = vmatprep.subr.bf16.mxu0 0
        %1861 = vmatpush1.bf16.msra.mxu0 %v1567
        %1862 = vmatprep.subr.bf16.mxu0 0
        %1863 = vmatpush1.bf16.msra.mxu0 %v1570
        %1864 = vmatprep.mubr.bf16.mxu0 %v1659
        %1865 = vmatmul.mubr.bf16.gmra.mrb[0].mxu0 %v1658
        %v1866 = vpop.f32.mrb[0].mxu0
        %v1867 = vadd.f32 %v1827, %v1866
        %v1868 = vpop.f32.mrb[0].mxu0
        %v1869 = vpop.f32.mrb[0].mxu0
        %v1870 = vpop.f32.mrb[0].mxu0
        %1871 = vdwg.mxu0
        %1872 = vmatprep.subr.bf16.mxu0 0
        %1873 = vmatpush1.bf16.msra.mxu0 %v1617
        %1874 = vmatprep.subr.bf16.mxu0 0
        %1875 = vmatpush1.bf16.msra.mxu0 %v1620
        %1876 = vmatprep.subr.bf16.mxu0 0
        %1877 = vmatpush1.bf16.msra.mxu0 %v1623
        %1878 = vmatprep.subr.bf16.mxu0 0
        %1879 = vmatpush1.bf16.msra.mxu0 %v1626
        %1880 = vmatprep.subr.bf16.mxu0 0
        %1881 = vmatpush1.bf16.msra.mxu0 0
        %1882 = vmatprep.subr.bf16.mxu0 0
        %1883 = vmatpush1.bf16.msra.mxu0 0
        %1884 = vmatprep.subr.bf16.mxu0 0
        %1885 = vmatpush1.bf16.msra.mxu0 0
        %1886 = vmatprep.subr.bf16.mxu0 0
        %1887 = vmatpush1.bf16.msra.mxu0 0
        %1888 = vmatprep.subr.bf16.mxu0 0
        %1889 = vmatpush1.bf16.msra.mxu0 0
        %1890 = vmatprep.subr.bf16.mxu0 0
        %1891 = vmatpush1.bf16.msra.mxu0 0
        %1892 = vmatprep.subr.bf16.mxu0 0
        %1893 = vmatpush1.bf16.msra.mxu0 0
        %1894 = vmatprep.subr.bf16.mxu0 0
        %1895 = vmatpush1.bf16.msra.mxu0 0
        %1896 = vmatprep.subr.bf16.mxu0 0
        %1897 = vmatpush1.bf16.msra.mxu0 0
        %1898 = vmatprep.subr.bf16.mxu0 0
        %1899 = vmatpush1.bf16.msra.mxu0 0
        %1900 = vmatprep.subr.bf16.mxu0 0
        %1901 = vmatpush1.bf16.msra.mxu0 0
        %1902 = vmatprep.subr.bf16.mxu0 0
        %1903 = vmatpush1.bf16.msra.mxu0 0
        %1904 = vmatprep.mubr.bf16.mxu0 0
        %1905 = vmatmul.mubr.bf16.gmra.mrb[0].mxu0 %v1667
        %v1906 = vpop.f32.mrb[0].mxu0
        %v1907 = vadd.f32 %v1867, %v1906
        %v1908 = vpop.f32.mrb[0].mxu0
        %v1909 = vpop.f32.mrb[0].mxu0
        %v1910 = vpop.f32.mrb[0].mxu0
        %1911 = vdwg.mxu0
        %1912 = vst [vmem:[%s284] sm:$0xff] %v1786
        %1913 = vst [vmem:[%s284 + $0x8] sm:$0xff] %v1788
        %1914 = vst [vmem:[%s284 + $0x10] sm:$0xff] %v1907
        %s1915 = sand.u32 %s163, 1
        %s1916 = scalar_lea.sflag [#allocation4], %s1915
        %s1917 = sand.u32 %s163, 1
        %s1918 = smul.addr %s1917, 24
        %s1919 = scalar_lea.vmem [#allocation7], %s1918
        // Predicated region
        $region53: #{tpu_custom_call.1} parent=43 // pred_check
          %p1920 = pneg %p173
        $region54: #{tpu_custom_call.1} parent=43 // pred_check_branch
          %1922 = sbr.rel (%p1920) target = $region56
        $region55: #{tpu_custom_call.1} parent=43 // pred_region
          %s1924 = ssub.s32 384, 384
          %1925 = vsyncadd %s1916, %s1924
          %s1926 = smul.addr %s24, 3
          %s1927 = smul.addr %s1926, 128
          %s1928 = scalar_lea.hbm %s6, %s1927
          %s1930 = sshll.u32 %s1919, 4
          %s1931 = int_to_ptr.vmem [resolvable:$true] %s1930
          %1933 = dma.vmem_to_hbm [thread:$0]  %s1931, 384, %s1928, %s1916
        $region56: #{tpu_custom_call.1} parent=43 // pred_fallthru
          _
      $region44: #{tpu_custom_call.1} parent=5 // pred_fallthru
        _
      %p1934 = scmp.le.s32.totalorder 2, %s19
      // Predicated region
      $region57: #{tpu_custom_call.1} parent=5 // pred_check
        %p1935 = pneg %p1934
      $region58: #{tpu_custom_call.1} parent=5 // pred_check_branch
        %1937 = sbr.rel (%p1935) target = $region60
      $region59: #{tpu_custom_call.1} parent=5 // pred_region
        %s1938 = ssub.s32 %s19, 2
        // Predicated region
        $region61: #{tpu_custom_call.1} parent=59 // pred_check
          %p1939 = pneg %p179
        $region62: #{tpu_custom_call.1} parent=59 // pred_check_branch
          %1941 = sbr.rel (%p1939) target = $region64
        $region63: #{tpu_custom_call.1} parent=59 // pred_region
          %s1942 = sand.u32 %s164, 1
          %s1943 = scalar_lea.sflag [#allocation4], %s1942
          %s1944 = sand.u32 %s164, 1
          %s1945 = smul.addr %s1944, 24
          %s1946 = scalar_lea.vmem [#allocation7], %s1945
          %1947 = dma.done %s1943, 384
        $region64: #{tpu_custom_call.1} parent=59 // pred_fallthru
          _
      $region60: #{tpu_custom_call.1} parent=5 // pred_fallthru
        _
    $region6: #{tpu_custom_call.1} parent=1 // loop_footer
      %s23 = sadd.s32 1, %s19
    $region7: #{tpu_custom_call.1} parent=1 // loop_footer_branch
      %18 = sbr.rel target = $region3
    $region8: #{tpu_custom_call.1} parent=1 // loop_exit
      _
    %1948 = vsyncpa [#allocation3], 1
    %s1949 = scalar_lea.sflag [#allocation3], 1
    %1950 = vsyncpa %s1949, 1
    %1951 = vsyncpa [#allocation6], 1
    %1952 = vsyncpa [#allocation4], 1
    %s1953 = scalar_lea.sflag [#allocation4], 1
    %1954 = vsyncpa %s1953, 1

</llo_original>
